<compile_context>
chip_gen: v5e
topology: v5e:2x2
jax: 0.10.0
libtpu: 0.0.40
codegen_flags: <defaults>
</compile_context>

<pallas_src>
import jax
import jax.numpy as jnp
import numpy as np
from jax.experimental import pallas as pl
from jax.experimental.pallas import tpu as pltpu

NUM_LAYERS = 4  # nn.LSTM(num_layers=4, bidirectional=True, batch_first=True)


# ----------------------------------------------------------------------------
# Fused kernel: last-frame 4-layer bi-LSTM (directions fused) + fc/classifier
# head + sentiment head.
# ----------------------------------------------------------------------------
def bpm_mt_kernel(x_ref, text_ref, wx0_ref, wx_ref, wh_ref, b_ref,
                  wtext_ref, fcwa_ref, fcb_ref, clsw_ref, clsb_ref,
                  sfcb_ref, sclsw_ref, sclsb_ref,
                  logit_ref, sent_ref):
    f32 = jnp.float32
    B, H = x_ref.shape          # B = LSTM seq length (torch batch dim), H = n_mfcc
    H2, H4, H6, H8 = 2 * H, 4 * H, 6 * H, 8 * H
    n_fc = fcb_ref.shape[1]     # fc_layer output size (128)

    # Hoisted lane / row masks (constants, reused by every layer and step).
    lane8 = jax.lax.broadcasted_iota(jnp.int32, (1, H8), 1)
    dir0_mask = (lane8 % H2) < H          # fused-gate lanes belonging to direction 0
    lane2 = jax.lax.broadcasted_iota(jnp.int32, (1, H2), 1)
    fwd_mask = lane2 < H                  # fwd half of a (1, 2H) state / output row
    row_iota = jax.lax.broadcasted_iota(jnp.int32, (B, H2), 0)

    # The only 768-deep contraction (fc text-half || sentiment-fc fused): issued up
    # front so the MXU streams it while the serial LSTM chain runs.
    tproj = jnp.dot(text_ref[...], wtext_ref[...], preferred_element_type=f32)  # (B, 192)

    # ---- 4-layer bidirectional LSTM, both directions fused per cell -------------
    # Gate layout along the 8H lane axis: [ i | f | g | o ], each block 2H wide and
    # internally [dir0 | dir1]; the h/c state layout is [h_fwd | h_bwd] (2H lanes).
    layer_in = x_ref[...]                  # (B, H) layer-0 input (shared by both dirs)
    for layer in range(NUM_LAYERS):
        wx = wx0_ref[...] if layer == 0 else wx_ref[layer - 1]   # (in_dim, 8H)
        wh = wh_ref[layer]                                        # (2H, 8H) block-diag
        # Batched input projection for all B timesteps + fused bias (off the chain).
        xw_all = jnp.dot(layer_in, wx, preferred_element_type=f32) + b_ref[layer]  # (B, 8H)

        # Per-step fused rows: dir0 columns read time s, dir1 columns read time B-1-s.
        xw_step = [jnp.where(dir0_mask, xw_all[s:s + 1, :], xw_all[B - 1 - s:B - s, :])
                   for s in range(B)]

        # Serial recurrence: one cell per timestep covers BOTH directions.
        # NOTE: B is tiny (2); if it grows, switch these unrolled Python loops to
        # lax.fori_loop with a small VMEM scratch to keep vreg pressure flat.
        h = None
        c = None
        h_steps = []
        for s in range(B):
            if s == 0:
                gates = xw_step[0]                    # h0 = c0 = 0: skip the zero dot
            else:
                gates = xw_step[s] + jnp.dot(h, wh, preferred_element_type=f32)  # (1, 8H)
            sig = jax.nn.sigmoid(gates)               # one full-width EUP push
            i_g = sig[:, 0:H2]
            f_g = sig[:, H2:H4]
            o_g = sig[:, H6:H8]
            g_g = jnp.tanh(gates[:, H4:H6])           # only the g block needs tanh
            c = i_g * g_g if s == 0 else f_g * c + i_g * g_g
            h = o_g * jnp.tanh(c)
            h_steps.append(h)

        # Re-align to per-position rows: position t = [fwd(step t) | bwd(step B-1-t)]
        # and stack into a (B, 2H) slab -- register resident, no VMEM staging.
        pos_rows = [jnp.where(fwd_mask, h_steps[t], h_steps[B - 1 - t])
                    for t in range(B)]
        stacked = jnp.broadcast_to(pos_rows[0], (B, H2))
        for t in range(1, B):
            stacked = jnp.where(row_iota == t,
                                jnp.broadcast_to(pos_rows[t], (B, H2)), stacked)
        layer_in = stacked                             # next layer / head input (B, 2H)

    audio_last = layer_in                              # == torch `audio[-1]`, (B, 2H)

    # ---- heads (dropout == identity in eval mode) --------------------------------
    # concat(audio, text) expressed as split matmuls; the text halves were fused above.
    x_fc = (jnp.dot(audio_last, fcwa_ref[...], preferred_element_type=f32)
            + tproj[:, 0:n_fc] + fcb_ref[...])
    logit_ref[...] = (jnp.dot(x_fc, clsw_ref[...], preferred_element_type=f32)
                      + clsb_ref[...])
    s_fc = tproj[:, n_fc:] + sfcb_ref[...]
    sent_ref[...] = (jnp.dot(s_fc, sclsw_ref[...], preferred_element_type=f32)
                     + sclsb_ref[...])


# ----------------------------------------------------------------------------
# Parameters (PyTorch layout) and one-time packing into kernel-ready arrays.
# ----------------------------------------------------------------------------
def init_params(key, H, text_dim=768, output_size=128, num_class=4, sent_out=64):
    keys = jax.random.split(key, 64)
    it = iter(keys)

    def unif(shape, scale):
        return jax.random.uniform(next(it), shape, jnp.float32, -scale, scale)

    lstm = []
    s = 1.0 / np.sqrt(H)
    for l in range(NUM_LAYERS):
        in_dim = H if l == 0 else 2 * H
        dirs = []
        for _d in range(2):
            dirs.append((unif((4 * H, in_dim), s),   # W_ih (rows i|f|g|o, PyTorch layout)
                         unif((4 * H, H), s),        # W_hh
                         unif((4 * H,), s),          # b_ih
                         unif((4 * H,), s)))         # b_hh
        lstm.append(dirs)

    cat_dim = text_dim + 2 * H
    return dict(
        lstm=lstm,
        fc_w=unif((output_size, cat_dim), 1.0 / np.sqrt(cat_dim)),
        fc_b=unif((output_size,), 1.0 / np.sqrt(cat_dim)),
        cls_w=unif((num_class, output_size), 1.0 / np.sqrt(output_size)),
        cls_b=unif((num_class,), 1.0 / np.sqrt(output_size)),
        sfc_w=unif((sent_out, text_dim), 1.0 / np.sqrt(text_dim)),
        sfc_b=unif((sent_out,), 1.0 / np.sqrt(text_dim)),
        scls_w=unif((5, sent_out), 1.0 / np.sqrt(sent_out)),
        scls_b=unif((5,), 1.0 / np.sqrt(sent_out)),
    )


def pack_params(params):
    """One-time (hoisted out of forward) packing of PyTorch-layout params.

    Per LSTM layer, BOTH directions are fused into a single cell:
      * wx (in_dim, 8H): fused input weights; lane layout [ i | f | g | o ], each
        gate block 2H wide and itself laid out [dir0 | dir1].
      * wh (2H, 8H): block-diagonal recurrent weights (dir0 state rows feed only
        dir0 gate columns, dir1 rows only dir1 columns).
      * b  (1, 8H): fused b_ih + b_hh in the same layout.
    Head weights are pre-transposed; the two 768-deep text contractions (fc
    text-half and sentiment fc) are fused into a single (768, 128 + 64) weight.
    """
    lstm = params['lstm']
    H = lstm[0][0][1].shape[1]   # W_hh: (4H, H)
    H2 = 2 * H

    wx_layers, wh_layers, b_layers = [], [], []
    for l in range(NUM_LAYERS):
        in_dim = H if l == 0 else H2
        wx = np.zeros((in_dim, 8 * H), np.float32)
        wh = np.zeros((H2, 8 * H), np.float32)
        bb = np.zeros((1, 8 * H), np.float32)
        for d in range(2):
            Wih, Whh, bih, bhh = (np.asarray(a, np.float32) for a in lstm[l][d])
            for gi in range(4):                                  # PyTorch order i|f|g|o
                rows = slice(gi * H, (gi + 1) * H)
                cols = slice(gi * H2 + d * H, gi * H2 + (d + 1) * H)
                wx[:, cols] = Wih[rows, :].T
                wh[d * H:(d + 1) * H, cols] = Whh[rows, :].T
                bb[0, cols] = bih[rows] + bhh[rows]
        wx_layers.append(wx)
        wh_layers.append(wh)
        b_layers.append(bb)

    fc_w = np.asarray(params['fc_w'], np.float32)                # (128, 2H + 768)
    sfc_w = np.asarray(params['sfc_w'], np.float32)              # (64, 768)
    wtext = np.concatenate([fc_w[:, H2:].T, sfc_w.T], axis=1)    # (768, 128 + 64)

    return dict(
        wx0=jnp.asarray(wx_layers[0]),                           # (H, 8H)   layer 0
        wx=jnp.asarray(np.stack(wx_layers[1:])),                 # (3, 2H, 8H) layers 1..3
        wh=jnp.asarray(np.stack(wh_layers)),                     # (4, 2H, 8H)
        b=jnp.asarray(np.stack(b_layers)),                       # (4, 1, 8H)
        wtext=jnp.asarray(wtext),                                # (768, 192) fused text
        fcwa=jnp.asarray(fc_w[:, :H2].T),                        # (2H, 128) audio half
        fcb=jnp.asarray(np.asarray(params['fc_b'], np.float32).reshape(1, -1)),
        clsw=jnp.asarray(np.asarray(params['cls_w'], np.float32).T),
        clsb=jnp.asarray(np.asarray(params['cls_b'], np.float32).reshape(1, -1)),
        sfcb=jnp.asarray(np.asarray(params['sfc_b'], np.float32).reshape(1, -1)),
        sclsw=jnp.asarray(np.asarray(params['scls_w'], np.float32).T),
        sclsb=jnp.asarray(np.asarray(params['scls_b'], np.float32).reshape(1, -1)),
    )


# ----------------------------------------------------------------------------
# Forward pass (single fused, ungridded, VMEM-resident Pallas call).
# ----------------------------------------------------------------------------
@jax.jit
def bpm_mt_forward(audio_mfcc, text, packed):
    B = audio_mfcc.shape[0]
    # Only the last MFCC frame (batch row T-1 of permute(2,0,1)) is consumed by
    # `audio = audio[-1]`; LSTM batch rows are independent -> compute only that row.
    x_seq = audio_mfcc[:, :, -1].astype(jnp.float32)   # (B, H)
    text = text.astype(jnp.float32)

    vmem = pl.BlockSpec(memory_space=pltpu.MemorySpace.VMEM)
    num_class = packed['clsb'].shape[1]
    num_sent = packed['sclsb'].shape[1]

    logit, sent = pl.pallas_call(
        bpm_mt_kernel,
        out_shape=(jax.ShapeDtypeStruct((B, num_class), jnp.float32),
                   jax.ShapeDtypeStruct((B, num_sent), jnp.float32)),
        in_specs=[vmem] * 14,
        out_specs=(vmem, vmem),
    )(x_seq, text,
      packed['wx0'], packed['wx'], packed['wh'], packed['b'],
      packed['wtext'], packed['fcwa'], packed['fcb'],
      packed['clsw'], packed['clsb'],
      packed['sfcb'], packed['sclsw'], packed['sclsb'])

    return {'logit': logit, 'sentiment': sent}


# ----------------------------------------------------------------------------
# Pure-JAX reference (mirrors the PyTorch math directly, full T rows).
# Matmuls run at HIGHEST precision so the f32 baseline is exact.
# ----------------------------------------------------------------------------
def reference_forward(audio_mfcc, text, params):
    def mm(a, b):
        return jnp.dot(a, b, precision=jax.lax.Precision.HIGHEST)

    B, H, T = audio_mfcc.shape
    layer_in = jnp.transpose(audio_mfcc, (2, 0, 1))    # (T, B, H): batch=T, seq=B
    for l in range(NUM_LAYERS):
        outs = []
        for d in range(2):
            Wih, Whh, bih, bhh = params['lstm'][l][d]
            h = jnp.zeros((T, H), jnp.float32)
            c = jnp.zeros((T, H), jnp.float32)
            hs = [None] * B
            order = range(B) if d == 0 else range(B - 1, -1, -1)
            for t in order:
                xt = layer_in[:, t, :]
                gates = mm(xt, Wih.T) + mm(h, Whh.T) + bih + bhh
                i = jax.nn.sigmoid(gates[:, 0:H])
                f = jax.nn.sigmoid(gates[:, H:2 * H])
                g = jnp.tanh(gates[:, 2 * H:3 * H])
                o = jax.nn.sigmoid(gates[:, 3 * H:4 * H])
                c = f * c + i * g
                h = o * jnp.tanh(c)
                hs[t] = h
            outs.append(jnp.stack(hs, axis=1))
        layer_in = jnp.concatenate(outs, axis=-1)
    audio_last = layer_in[-1]                           # (B, 2H)
    xcat = jnp.concatenate([audio_last, text], axis=1)
    xfc = mm(xcat, params['fc_w'].T) + params['fc_b']
    logit = mm(xfc, params['cls_w'].T) + params['cls_b']
    s = mm(text, params['sfc_w'].T) + params['sfc_b']
    sent = mm(s, params['scls_w'].T) + params['scls_b']
    return {'logit': logit, 'sentiment': sent}


if __name__ == "__main__":
    key = jax.random.PRNGKey(0)
    kp, ka, kt = jax.random.split(key, 3)

    B, H, T = 2, 8, 16   # batch=2, n_mfcc=8, 16 MFCC frames
    params = init_params(kp, H)
    packed = pack_params(params)   # one-time parameter prep (hoisted out of forward)

    audio_mfcc = jax.random.normal(ka, (B, H, T), jnp.float32)  # mfcc_extractor output
    text = jax.random.normal(kt, (B, 768), jnp.float32)         # pooled BERT output

    out = bpm_mt_forward(audio_mfcc, text, packed)
    jax.block_until_ready(out)

    ref = reference_forward(audio_mfcc, text, packed if False else params)
    # Tolerance tightened 4-10x from the previous 2e-2: with matching f32 math the
    # expected difference is ~1e-5; the remaining slack only covers possible MXU
    # f32 pass-decomposition differences between the Mosaic kernel and XLA's
    # highest-precision reference matmuls.
    np.testing.assert_allclose(out['logit'], ref['logit'], rtol=5e-3, atol=2e-3)
    np.testing.assert_allclose(out['sentiment'], ref['sentiment'], rtol=5e-3, atol=2e-3)

    print("KERNEL_OK")
</pallas_src>

<mosaic_0001>
module attributes {stable_mosaic.version = 11 : i64} {
  func.func @bpm_mt_kernel(%arg0: memref<2x8xf32, #tpu.memory_space<vmem>>, %arg1: memref<2x768xf32, #tpu.memory_space<vmem>>, %arg2: memref<8x64xf32, #tpu.memory_space<vmem>>, %arg3: memref<3x16x64xf32, #tpu.memory_space<vmem>>, %arg4: memref<4x16x64xf32, #tpu.memory_space<vmem>>, %arg5: memref<4x1x64xf32, #tpu.memory_space<vmem>>, %arg6: memref<768x192xf32, #tpu.memory_space<vmem>>, %arg7: memref<16x128xf32, #tpu.memory_space<vmem>>, %arg8: memref<1x128xf32, #tpu.memory_space<vmem>>, %arg9: memref<128x4xf32, #tpu.memory_space<vmem>>, %arg10: memref<1x4xf32, #tpu.memory_space<vmem>>, %arg11: memref<1x64xf32, #tpu.memory_space<vmem>>, %arg12: memref<64x5xf32, #tpu.memory_space<vmem>>, %arg13: memref<1x5xf32, #tpu.memory_space<vmem>>, %arg14: memref<2x4xf32, #tpu.memory_space<vmem>>, %arg15: memref<2x5xf32, #tpu.memory_space<vmem>>) attributes {dimension_semantics = [], scalar_prefetch = 0 : i64, scratch_operands = 0 : i64, tpu.core_type = #tpu.core_type<tc>} {
    %0 = tpu.iota {dimensions = array<i32: 1>} : vector<1x64xi32>
    %c16_i32 = arith.constant 16 : i32
    %c0_i32 = arith.constant 0 : i32
    %1 = arith.cmpi eq, %c16_i32, %c0_i32 : i32
    %c1_i32 = arith.constant 1 : i32
    %2 = arith.select %1, %c1_i32, %c16_i32 : i32
    %3 = vector.broadcast %2 : i32 to vector<1x64xi32>
    %4 = arith.remsi %0, %3 : vector<1x64xi32>
    %c0_i32_0 = arith.constant 0 : i32
    %5 = vector.broadcast %c0_i32_0 : i32 to vector<1x64xi32>
    %6 = arith.cmpi ne, %4, %5 : vector<1x64xi32>
    %c0_i32_1 = arith.constant 0 : i32
    %7 = vector.broadcast %c0_i32_1 : i32 to vector<1x64xi32>
    %8 = arith.cmpi slt, %4, %7 : vector<1x64xi32>
    %c0_i32_2 = arith.constant 0 : i32
    %9 = arith.cmpi slt, %2, %c0_i32_2 : i32
    %10 = vector.broadcast %9 : i1 to vector<1x64xi1>
    %11 = vector.broadcast %10 : vector<1x64xi1> to vector<1x64xi1>
    %12 = arith.xori %8, %11 : vector<1x64xi1>
    %13 = arith.andi %12, %6 : vector<1x64xi1>
    %14 = vector.broadcast %2 : i32 to vector<1x64xi32>
    %15 = arith.addi %4, %14 : vector<1x64xi32>
    %16 = arith.select %13, %15, %4 : vector<1x64xi1>, vector<1x64xi32>
    %c8_i32 = arith.constant 8 : i32
    %17 = vector.broadcast %c8_i32 : i32 to vector<1x64xi32>
    %18 = arith.cmpi slt, %16, %17 : vector<1x64xi32>
    %19 = tpu.iota {dimensions = array<i32: 1>} : vector<1x16xi32>
    %c8_i32_3 = arith.constant 8 : i32
    %20 = vector.broadcast %c8_i32_3 : i32 to vector<1x16xi32>
    %21 = arith.cmpi slt, %19, %20 : vector<1x16xi32>
    %22 = tpu.iota {dimensions = array<i32: 0>} : vector<2x16xi32>
    %c0 = arith.constant 0 : index
    %c0_4 = arith.constant 0 : index
    %23 = vector.load %arg1[%c0, %c0_4] : memref<2x768xf32, #tpu.memory_space<vmem>>, vector<2x768xf32>
    %c0_5 = arith.constant 0 : index
    %c0_6 = arith.constant 0 : index
    %24 = vector.load %arg6[%c0_5, %c0_6] : memref<768x192xf32, #tpu.memory_space<vmem>>, vector<768x192xf32>
    %cst = arith.constant dense<0.000000e+00> : vector<2x192xf32>
    %25 = tpu.matmul %23, %24, %cst {dimension_numbers = #tpu.dot_dimension_numbers<[1], [0], [0], [1], [0, 0, 1, 1], [], []>} : vector<2x768xf32>, vector<768x192xf32>, vector<2x192xf32> -> vector<2x192xf32>
    %c0_7 = arith.constant 0 : index
    %c0_8 = arith.constant 0 : index
    %26 = vector.load %arg0[%c0_7, %c0_8] : memref<2x8xf32, #tpu.memory_space<vmem>>, vector<2x8xf32>
    %c0_9 = arith.constant 0 : index
    %c0_10 = arith.constant 0 : index
    %27 = vector.load %arg2[%c0_9, %c0_10] : memref<8x64xf32, #tpu.memory_space<vmem>>, vector<8x64xf32>
    %c0_11 = arith.constant 0 : index
    %c0_12 = arith.constant 0 : index
    %c0_13 = arith.constant 0 : index
    %28 = vector.load %arg4[%c0_11, %c0_12, %c0_13] : memref<4x16x64xf32, #tpu.memory_space<vmem>>, vector<1x16x64xf32>
    %29 = vector.shape_cast %28 : vector<1x16x64xf32> to vector<16x64xf32>
    %cst_14 = arith.constant dense<0.000000e+00> : vector<2x64xf32>
    %30 = tpu.matmul %26, %27, %cst_14 {dimension_numbers = #tpu.dot_dimension_numbers<[1], [0], [0], [1], [0, 0, 1, 1], [], []>} : vector<2x8xf32>, vector<8x64xf32>, vector<2x64xf32> -> vector<2x64xf32>
    %c0_15 = arith.constant 0 : index
    %c0_16 = arith.constant 0 : index
    %c0_17 = arith.constant 0 : index
    %31 = vector.load %arg5[%c0_15, %c0_16, %c0_17] : memref<4x1x64xf32, #tpu.memory_space<vmem>>, vector<1x1x64xf32>
    %32 = vector.shape_cast %31 : vector<1x1x64xf32> to vector<1x64xf32>
    %33 = vector.broadcast %32 : vector<1x64xf32> to vector<2x64xf32>
    %34 = arith.addf %30, %33 : vector<2x64xf32>
    %35 = vector.extract_strided_slice %34 {offsets = [0, 0], sizes = [1, 64], strides = [1, 1]} : vector<2x64xf32> to vector<1x64xf32>
    %36 = vector.extract_strided_slice %34 {offsets = [1, 0], sizes = [1, 64], strides = [1, 1]} : vector<2x64xf32> to vector<1x64xf32>
    %37 = arith.select %18, %35, %36 : vector<1x64xi1>, vector<1x64xf32>
    %38 = vector.extract_strided_slice %34 {offsets = [1, 0], sizes = [1, 64], strides = [1, 1]} : vector<2x64xf32> to vector<1x64xf32>
    %39 = vector.extract_strided_slice %34 {offsets = [0, 0], sizes = [1, 64], strides = [1, 1]} : vector<2x64xf32> to vector<1x64xf32>
    %40 = arith.select %18, %38, %39 : vector<1x64xi1>, vector<1x64xf32>
    %41 = arith.negf %37 : vector<1x64xf32>
    %42 = math.exp %41 : vector<1x64xf32>
    %cst_18 = arith.constant 1.000000e+00 : f32
    %43 = vector.broadcast %cst_18 : f32 to vector<1x64xf32>
    %44 = arith.addf %43, %42 : vector<1x64xf32>
    %45 = arith.divf %43, %44 : vector<1x64xf32>
    %46 = vector.extract_strided_slice %45 {offsets = [0, 0], sizes = [1, 16], strides = [1, 1]} : vector<1x64xf32> to vector<1x16xf32>
    %47 = vector.extract_strided_slice %45 {offsets = [0, 48], sizes = [1, 16], strides = [1, 1]} : vector<1x64xf32> to vector<1x16xf32>
    %48 = vector.extract_strided_slice %37 {offsets = [0, 32], sizes = [1, 16], strides = [1, 1]} : vector<1x64xf32> to vector<1x16xf32>
    %49 = math.tanh %48 : vector<1x16xf32>
    %50 = arith.mulf %46, %49 : vector<1x16xf32>
    %51 = math.tanh %50 : vector<1x16xf32>
    %52 = arith.mulf %47, %51 : vector<1x16xf32>
    %cst_19 = arith.constant dense<0.000000e+00> : vector<1x64xf32>
    %53 = tpu.matmul %52, %29, %cst_19 {dimension_numbers = #tpu.dot_dimension_numbers<[1], [0], [0], [1], [0, 0, 1, 1], [], []>} : vector<1x16xf32>, vector<16x64xf32>, vector<1x64xf32> -> vector<1x64xf32>
    %54 = arith.addf %40, %53 : vector<1x64xf32>
    %55 = arith.negf %54 : vector<1x64xf32>
    %56 = math.exp %55 : vector<1x64xf32>
    %cst_20 = arith.constant 1.000000e+00 : f32
    %57 = vector.broadcast %cst_20 : f32 to vector<1x64xf32>
    %58 = arith.addf %57, %56 : vector<1x64xf32>
    %59 = arith.divf %57, %58 : vector<1x64xf32>
    %60 = vector.extract_strided_slice %59 {offsets = [0, 0], sizes = [1, 16], strides = [1, 1]} : vector<1x64xf32> to vector<1x16xf32>
    %61 = vector.extract_strided_slice %59 {offsets = [0, 16], sizes = [1, 16], strides = [1, 1]} : vector<1x64xf32> to vector<1x16xf32>
    %62 = vector.extract_strided_slice %59 {offsets = [0, 48], sizes = [1, 16], strides = [1, 1]} : vector<1x64xf32> to vector<1x16xf32>
    %63 = vector.extract_strided_slice %54 {offsets = [0, 32], sizes = [1, 16], strides = [1, 1]} : vector<1x64xf32> to vector<1x16xf32>
    %64 = math.tanh %63 : vector<1x16xf32>
    %65 = arith.mulf %61, %50 : vector<1x16xf32>
    %66 = arith.mulf %60, %64 : vector<1x16xf32>
    %67 = arith.addf %65, %66 : vector<1x16xf32>
    %68 = math.tanh %67 : vector<1x16xf32>
    %69 = arith.mulf %62, %68 : vector<1x16xf32>
    %70 = arith.select %21, %52, %69 : vector<1x16xi1>, vector<1x16xf32>
    %71 = arith.select %21, %69, %52 : vector<1x16xi1>, vector<1x16xf32>
    %72 = vector.shape_cast %70 : vector<1x16xf32> to vector<1x16xf32>
    %73 = vector.broadcast %72 : vector<1x16xf32> to vector<2x16xf32>
    %c1_i32_21 = arith.constant 1 : i32
    %74 = vector.broadcast %c1_i32_21 : i32 to vector<2x16xi32>
    %75 = arith.cmpi eq, %22, %74 : vector<2x16xi32>
    %76 = vector.shape_cast %71 : vector<1x16xf32> to vector<1x16xf32>
    %77 = vector.broadcast %76 : vector<1x16xf32> to vector<2x16xf32>
    %78 = arith.select %75, %77, %73 : vector<2x16xi1>, vector<2x16xf32>
    %c0_22 = arith.constant 0 : index
    %c0_23 = arith.constant 0 : index
    %c0_24 = arith.constant 0 : index
    %79 = vector.load %arg3[%c0_22, %c0_23, %c0_24] : memref<3x16x64xf32, #tpu.memory_space<vmem>>, vector<1x16x64xf32>
    %80 = vector.shape_cast %79 : vector<1x16x64xf32> to vector<16x64xf32>
    %c1 = arith.constant 1 : index
    %c0_25 = arith.constant 0 : index
    %c0_26 = arith.constant 0 : index
    %81 = vector.load %arg4[%c1, %c0_25, %c0_26] : memref<4x16x64xf32, #tpu.memory_space<vmem>>, vector<1x16x64xf32>
    %82 = vector.shape_cast %81 : vector<1x16x64xf32> to vector<16x64xf32>
    %cst_27 = arith.constant dense<0.000000e+00> : vector<2x64xf32>
    %83 = tpu.matmul %78, %80, %cst_27 {dimension_numbers = #tpu.dot_dimension_numbers<[1], [0], [0], [1], [0, 0, 1, 1], [], []>} : vector<2x16xf32>, vector<16x64xf32>, vector<2x64xf32> -> vector<2x64xf32>
    %c1_28 = arith.constant 1 : index
    %c0_29 = arith.constant 0 : index
    %c0_30 = arith.constant 0 : index
    %84 = vector.load %arg5[%c1_28, %c0_29, %c0_30] : memref<4x1x64xf32, #tpu.memory_space<vmem>>, vector<1x1x64xf32>
    %85 = vector.shape_cast %84 : vector<1x1x64xf32> to vector<1x64xf32>
    %86 = vector.broadcast %85 : vector<1x64xf32> to vector<2x64xf32>
    %87 = arith.addf %83, %86 : vector<2x64xf32>
    %88 = vector.extract_strided_slice %87 {offsets = [0, 0], sizes = [1, 64], strides = [1, 1]} : vector<2x64xf32> to vector<1x64xf32>
    %89 = vector.extract_strided_slice %87 {offsets = [1, 0], sizes = [1, 64], strides = [1, 1]} : vector<2x64xf32> to vector<1x64xf32>
    %90 = arith.select %18, %88, %89 : vector<1x64xi1>, vector<1x64xf32>
    %91 = vector.extract_strided_slice %87 {offsets = [1, 0], sizes = [1, 64], strides = [1, 1]} : vector<2x64xf32> to vector<1x64xf32>
    %92 = vector.extract_strided_slice %87 {offsets = [0, 0], sizes = [1, 64], strides = [1, 1]} : vector<2x64xf32> to vector<1x64xf32>
    %93 = arith.select %18, %91, %92 : vector<1x64xi1>, vector<1x64xf32>
    %94 = arith.negf %90 : vector<1x64xf32>
    %95 = math.exp %94 : vector<1x64xf32>
    %cst_31 = arith.constant 1.000000e+00 : f32
    %96 = vector.broadcast %cst_31 : f32 to vector<1x64xf32>
    %97 = arith.addf %96, %95 : vector<1x64xf32>
    %98 = arith.divf %96, %97 : vector<1x64xf32>
    %99 = vector.extract_strided_slice %98 {offsets = [0, 0], sizes = [1, 16], strides = [1, 1]} : vector<1x64xf32> to vector<1x16xf32>
    %100 = vector.extract_strided_slice %98 {offsets = [0, 48], sizes = [1, 16], strides = [1, 1]} : vector<1x64xf32> to vector<1x16xf32>
    %101 = vector.extract_strided_slice %90 {offsets = [0, 32], sizes = [1, 16], strides = [1, 1]} : vector<1x64xf32> to vector<1x16xf32>
    %102 = math.tanh %101 : vector<1x16xf32>
    %103 = arith.mulf %99, %102 : vector<1x16xf32>
    %104 = math.tanh %103 : vector<1x16xf32>
    %105 = arith.mulf %100, %104 : vector<1x16xf32>
    %cst_32 = arith.constant dense<0.000000e+00> : vector<1x64xf32>
    %106 = tpu.matmul %105, %82, %cst_32 {dimension_numbers = #tpu.dot_dimension_numbers<[1], [0], [0], [1], [0, 0, 1, 1], [], []>} : vector<1x16xf32>, vector<16x64xf32>, vector<1x64xf32> -> vector<1x64xf32>
    %107 = arith.addf %93, %106 : vector<1x64xf32>
    %108 = arith.negf %107 : vector<1x64xf32>
    %109 = math.exp %108 : vector<1x64xf32>
    %cst_33 = arith.constant 1.000000e+00 : f32
    %110 = vector.broadcast %cst_33 : f32 to vector<1x64xf32>
    %111 = arith.addf %110, %109 : vector<1x64xf32>
    %112 = arith.divf %110, %111 : vector<1x64xf32>
    %113 = vector.extract_strided_slice %112 {offsets = [0, 0], sizes = [1, 16], strides = [1, 1]} : vector<1x64xf32> to vector<1x16xf32>
    %114 = vector.extract_strided_slice %112 {offsets = [0, 16], sizes = [1, 16], strides = [1, 1]} : vector<1x64xf32> to vector<1x16xf32>
    %115 = vector.extract_strided_slice %112 {offsets = [0, 48], sizes = [1, 16], strides = [1, 1]} : vector<1x64xf32> to vector<1x16xf32>
    %116 = vector.extract_strided_slice %107 {offsets = [0, 32], sizes = [1, 16], strides = [1, 1]} : vector<1x64xf32> to vector<1x16xf32>
    %117 = math.tanh %116 : vector<1x16xf32>
    %118 = arith.mulf %114, %103 : vector<1x16xf32>
    %119 = arith.mulf %113, %117 : vector<1x16xf32>
    %120 = arith.addf %118, %119 : vector<1x16xf32>
    %121 = math.tanh %120 : vector<1x16xf32>
    %122 = arith.mulf %115, %121 : vector<1x16xf32>
    %123 = arith.select %21, %105, %122 : vector<1x16xi1>, vector<1x16xf32>
    %124 = arith.select %21, %122, %105 : vector<1x16xi1>, vector<1x16xf32>
    %125 = vector.shape_cast %123 : vector<1x16xf32> to vector<1x16xf32>
    %126 = vector.broadcast %125 : vector<1x16xf32> to vector<2x16xf32>
    %c1_i32_34 = arith.constant 1 : i32
    %127 = vector.broadcast %c1_i32_34 : i32 to vector<2x16xi32>
    %128 = arith.cmpi eq, %22, %127 : vector<2x16xi32>
    %129 = vector.shape_cast %124 : vector<1x16xf32> to vector<1x16xf32>
    %130 = vector.broadcast %129 : vector<1x16xf32> to vector<2x16xf32>
    %131 = arith.select %128, %130, %126 : vector<2x16xi1>, vector<2x16xf32>
    %c1_35 = arith.constant 1 : index
    %c0_36 = arith.constant 0 : index
    %c0_37 = arith.constant 0 : index
    %132 = vector.load %arg3[%c1_35, %c0_36, %c0_37] : memref<3x16x64xf32, #tpu.memory_space<vmem>>, vector<1x16x64xf32>
    %133 = vector.shape_cast %132 : vector<1x16x64xf32> to vector<16x64xf32>
    %c2 = arith.constant 2 : index
    %c0_38 = arith.constant 0 : index
    %c0_39 = arith.constant 0 : index
    %134 = vector.load %arg4[%c2, %c0_38, %c0_39] : memref<4x16x64xf32, #tpu.memory_space<vmem>>, vector<1x16x64xf32>
    %135 = vector.shape_cast %134 : vector<1x16x64xf32> to vector<16x64xf32>
    %cst_40 = arith.constant dense<0.000000e+00> : vector<2x64xf32>
    %136 = tpu.matmul %131, %133, %cst_40 {dimension_numbers = #tpu.dot_dimension_numbers<[1], [0], [0], [1], [0, 0, 1, 1], [], []>} : vector<2x16xf32>, vector<16x64xf32>, vector<2x64xf32> -> vector<2x64xf32>
    %c2_41 = arith.constant 2 : index
    %c0_42 = arith.constant 0 : index
    %c0_43 = arith.constant 0 : index
    %137 = vector.load %arg5[%c2_41, %c0_42, %c0_43] : memref<4x1x64xf32, #tpu.memory_space<vmem>>, vector<1x1x64xf32>
    %138 = vector.shape_cast %137 : vector<1x1x64xf32> to vector<1x64xf32>
    %139 = vector.broadcast %138 : vector<1x64xf32> to vector<2x64xf32>
    %140 = arith.addf %136, %139 : vector<2x64xf32>
    %141 = vector.extract_strided_slice %140 {offsets = [0, 0], sizes = [1, 64], strides = [1, 1]} : vector<2x64xf32> to vector<1x64xf32>
    %142 = vector.extract_strided_slice %140 {offsets = [1, 0], sizes = [1, 64], strides = [1, 1]} : vector<2x64xf32> to vector<1x64xf32>
    %143 = arith.select %18, %141, %142 : vector<1x64xi1>, vector<1x64xf32>
    %144 = vector.extract_strided_slice %140 {offsets = [1, 0], sizes = [1, 64], strides = [1, 1]} : vector<2x64xf32> to vector<1x64xf32>
    %145 = vector.extract_strided_slice %140 {offsets = [0, 0], sizes = [1, 64], strides = [1, 1]} : vector<2x64xf32> to vector<1x64xf32>
    %146 = arith.select %18, %144, %145 : vector<1x64xi1>, vector<1x64xf32>
    %147 = arith.negf %143 : vector<1x64xf32>
    %148 = math.exp %147 : vector<1x64xf32>
    %cst_44 = arith.constant 1.000000e+00 : f32
    %149 = vector.broadcast %cst_44 : f32 to vector<1x64xf32>
    %150 = arith.addf %149, %148 : vector<1x64xf32>
    %151 = arith.divf %149, %150 : vector<1x64xf32>
    %152 = vector.extract_strided_slice %151 {offsets = [0, 0], sizes = [1, 16], strides = [1, 1]} : vector<1x64xf32> to vector<1x16xf32>
    %153 = vector.extract_strided_slice %151 {offsets = [0, 48], sizes = [1, 16], strides = [1, 1]} : vector<1x64xf32> to vector<1x16xf32>
    %154 = vector.extract_strided_slice %143 {offsets = [0, 32], sizes = [1, 16], strides = [1, 1]} : vector<1x64xf32> to vector<1x16xf32>
    %155 = math.tanh %154 : vector<1x16xf32>
    %156 = arith.mulf %152, %155 : vector<1x16xf32>
    %157 = math.tanh %156 : vector<1x16xf32>
    %158 = arith.mulf %153, %157 : vector<1x16xf32>
    %cst_45 = arith.constant dense<0.000000e+00> : vector<1x64xf32>
    %159 = tpu.matmul %158, %135, %cst_45 {dimension_numbers = #tpu.dot_dimension_numbers<[1], [0], [0], [1], [0, 0, 1, 1], [], []>} : vector<1x16xf32>, vector<16x64xf32>, vector<1x64xf32> -> vector<1x64xf32>
    %160 = arith.addf %146, %159 : vector<1x64xf32>
    %161 = arith.negf %160 : vector<1x64xf32>
    %162 = math.exp %161 : vector<1x64xf32>
    %cst_46 = arith.constant 1.000000e+00 : f32
    %163 = vector.broadcast %cst_46 : f32 to vector<1x64xf32>
    %164 = arith.addf %163, %162 : vector<1x64xf32>
    %165 = arith.divf %163, %164 : vector<1x64xf32>
    %166 = vector.extract_strided_slice %165 {offsets = [0, 0], sizes = [1, 16], strides = [1, 1]} : vector<1x64xf32> to vector<1x16xf32>
    %167 = vector.extract_strided_slice %165 {offsets = [0, 16], sizes = [1, 16], strides = [1, 1]} : vector<1x64xf32> to vector<1x16xf32>
    %168 = vector.extract_strided_slice %165 {offsets = [0, 48], sizes = [1, 16], strides = [1, 1]} : vector<1x64xf32> to vector<1x16xf32>
    %169 = vector.extract_strided_slice %160 {offsets = [0, 32], sizes = [1, 16], strides = [1, 1]} : vector<1x64xf32> to vector<1x16xf32>
    %170 = math.tanh %169 : vector<1x16xf32>
    %171 = arith.mulf %167, %156 : vector<1x16xf32>
    %172 = arith.mulf %166, %170 : vector<1x16xf32>
    %173 = arith.addf %171, %172 : vector<1x16xf32>
    %174 = math.tanh %173 : vector<1x16xf32>
    %175 = arith.mulf %168, %174 : vector<1x16xf32>
    %176 = arith.select %21, %158, %175 : vector<1x16xi1>, vector<1x16xf32>
    %177 = arith.select %21, %175, %158 : vector<1x16xi1>, vector<1x16xf32>
    %178 = vector.shape_cast %176 : vector<1x16xf32> to vector<1x16xf32>
    %179 = vector.broadcast %178 : vector<1x16xf32> to vector<2x16xf32>
    %c1_i32_47 = arith.constant 1 : i32
    %180 = vector.broadcast %c1_i32_47 : i32 to vector<2x16xi32>
    %181 = arith.cmpi eq, %22, %180 : vector<2x16xi32>
    %182 = vector.shape_cast %177 : vector<1x16xf32> to vector<1x16xf32>
    %183 = vector.broadcast %182 : vector<1x16xf32> to vector<2x16xf32>
    %184 = arith.select %181, %183, %179 : vector<2x16xi1>, vector<2x16xf32>
    %c2_48 = arith.constant 2 : index
    %c0_49 = arith.constant 0 : index
    %c0_50 = arith.constant 0 : index
    %185 = vector.load %arg3[%c2_48, %c0_49, %c0_50] : memref<3x16x64xf32, #tpu.memory_space<vmem>>, vector<1x16x64xf32>
    %186 = vector.shape_cast %185 : vector<1x16x64xf32> to vector<16x64xf32>
    %c3 = arith.constant 3 : index
    %c0_51 = arith.constant 0 : index
    %c0_52 = arith.constant 0 : index
    %187 = vector.load %arg4[%c3, %c0_51, %c0_52] : memref<4x16x64xf32, #tpu.memory_space<vmem>>, vector<1x16x64xf32>
    %188 = vector.shape_cast %187 : vector<1x16x64xf32> to vector<16x64xf32>
    %cst_53 = arith.constant dense<0.000000e+00> : vector<2x64xf32>
    %189 = tpu.matmul %184, %186, %cst_53 {dimension_numbers = #tpu.dot_dimension_numbers<[1], [0], [0], [1], [0, 0, 1, 1], [], []>} : vector<2x16xf32>, vector<16x64xf32>, vector<2x64xf32> -> vector<2x64xf32>
    %c3_54 = arith.constant 3 : index
    %c0_55 = arith.constant 0 : index
    %c0_56 = arith.constant 0 : index
    %190 = vector.load %arg5[%c3_54, %c0_55, %c0_56] : memref<4x1x64xf32, #tpu.memory_space<vmem>>, vector<1x1x64xf32>
    %191 = vector.shape_cast %190 : vector<1x1x64xf32> to vector<1x64xf32>
    %192 = vector.broadcast %191 : vector<1x64xf32> to vector<2x64xf32>
    %193 = arith.addf %189, %192 : vector<2x64xf32>
    %194 = vector.extract_strided_slice %193 {offsets = [0, 0], sizes = [1, 64], strides = [1, 1]} : vector<2x64xf32> to vector<1x64xf32>
    %195 = vector.extract_strided_slice %193 {offsets = [1, 0], sizes = [1, 64], strides = [1, 1]} : vector<2x64xf32> to vector<1x64xf32>
    %196 = arith.select %18, %194, %195 : vector<1x64xi1>, vector<1x64xf32>
    %197 = vector.extract_strided_slice %193 {offsets = [1, 0], sizes = [1, 64], strides = [1, 1]} : vector<2x64xf32> to vector<1x64xf32>
    %198 = vector.extract_strided_slice %193 {offsets = [0, 0], sizes = [1, 64], strides = [1, 1]} : vector<2x64xf32> to vector<1x64xf32>
    %199 = arith.select %18, %197, %198 : vector<1x64xi1>, vector<1x64xf32>
    %200 = arith.negf %196 : vector<1x64xf32>
    %201 = math.exp %200 : vector<1x64xf32>
    %cst_57 = arith.constant 1.000000e+00 : f32
    %202 = vector.broadcast %cst_57 : f32 to vector<1x64xf32>
    %203 = arith.addf %202, %201 : vector<1x64xf32>
    %204 = arith.divf %202, %203 : vector<1x64xf32>
    %205 = vector.extract_strided_slice %204 {offsets = [0, 0], sizes = [1, 16], strides = [1, 1]} : vector<1x64xf32> to vector<1x16xf32>
    %206 = vector.extract_strided_slice %204 {offsets = [0, 48], sizes = [1, 16], strides = [1, 1]} : vector<1x64xf32> to vector<1x16xf32>
    %207 = vector.extract_strided_slice %196 {offsets = [0, 32], sizes = [1, 16], strides = [1, 1]} : vector<1x64xf32> to vector<1x16xf32>
    %208 = math.tanh %207 : vector<1x16xf32>
    %209 = arith.mulf %205, %208 : vector<1x16xf32>
    %210 = math.tanh %209 : vector<1x16xf32>
    %211 = arith.mulf %206, %210 : vector<1x16xf32>
    %cst_58 = arith.constant dense<0.000000e+00> : vector<1x64xf32>
    %212 = tpu.matmul %211, %188, %cst_58 {dimension_numbers = #tpu.dot_dimension_numbers<[1], [0], [0], [1], [0, 0, 1, 1], [], []>} : vector<1x16xf32>, vector<16x64xf32>, vector<1x64xf32> -> vector<1x64xf32>
    %213 = arith.addf %199, %212 : vector<1x64xf32>
    %214 = arith.negf %213 : vector<1x64xf32>
    %215 = math.exp %214 : vector<1x64xf32>
    %cst_59 = arith.constant 1.000000e+00 : f32
    %216 = vector.broadcast %cst_59 : f32 to vector<1x64xf32>
    %217 = arith.addf %216, %215 : vector<1x64xf32>
    %218 = arith.divf %216, %217 : vector<1x64xf32>
    %219 = vector.extract_strided_slice %218 {offsets = [0, 0], sizes = [1, 16], strides = [1, 1]} : vector<1x64xf32> to vector<1x16xf32>
    %220 = vector.extract_strided_slice %218 {offsets = [0, 16], sizes = [1, 16], strides = [1, 1]} : vector<1x64xf32> to vector<1x16xf32>
    %221 = vector.extract_strided_slice %218 {offsets = [0, 48], sizes = [1, 16], strides = [1, 1]} : vector<1x64xf32> to vector<1x16xf32>
    %222 = vector.extract_strided_slice %213 {offsets = [0, 32], sizes = [1, 16], strides = [1, 1]} : vector<1x64xf32> to vector<1x16xf32>
    %223 = math.tanh %222 : vector<1x16xf32>
    %224 = arith.mulf %220, %209 : vector<1x16xf32>
    %225 = arith.mulf %219, %223 : vector<1x16xf32>
    %226 = arith.addf %224, %225 : vector<1x16xf32>
    %227 = math.tanh %226 : vector<1x16xf32>
    %228 = arith.mulf %221, %227 : vector<1x16xf32>
    %229 = arith.select %21, %211, %228 : vector<1x16xi1>, vector<1x16xf32>
    %230 = arith.select %21, %228, %211 : vector<1x16xi1>, vector<1x16xf32>
    %231 = vector.shape_cast %229 : vector<1x16xf32> to vector<1x16xf32>
    %232 = vector.broadcast %231 : vector<1x16xf32> to vector<2x16xf32>
    %c1_i32_60 = arith.constant 1 : i32
    %233 = vector.broadcast %c1_i32_60 : i32 to vector<2x16xi32>
    %234 = arith.cmpi eq, %22, %233 : vector<2x16xi32>
    %235 = vector.shape_cast %230 : vector<1x16xf32> to vector<1x16xf32>
    %236 = vector.broadcast %235 : vector<1x16xf32> to vector<2x16xf32>
    %237 = arith.select %234, %236, %232 : vector<2x16xi1>, vector<2x16xf32>
    %c0_61 = arith.constant 0 : index
    %c0_62 = arith.constant 0 : index
    %238 = vector.load %arg7[%c0_61, %c0_62] : memref<16x128xf32, #tpu.memory_space<vmem>>, vector<16x128xf32>
    %cst_63 = arith.constant dense<0.000000e+00> : vector<2x128xf32>
    %239 = tpu.matmul %237, %238, %cst_63 {dimension_numbers = #tpu.dot_dimension_numbers<[1], [0], [0], [1], [0, 0, 1, 1], [], []>} : vector<2x16xf32>, vector<16x128xf32>, vector<2x128xf32> -> vector<2x128xf32>
    %240 = vector.extract_strided_slice %25 {offsets = [0, 0], sizes = [2, 128], strides = [1, 1]} : vector<2x192xf32> to vector<2x128xf32>
    %241 = arith.addf %239, %240 : vector<2x128xf32>
    %c0_64 = arith.constant 0 : index
    %c0_65 = arith.constant 0 : index
    %242 = vector.load %arg8[%c0_64, %c0_65] : memref<1x128xf32, #tpu.memory_space<vmem>>, vector<1x128xf32>
    %243 = vector.broadcast %242 : vector<1x128xf32> to vector<2x128xf32>
    %244 = arith.addf %241, %243 : vector<2x128xf32>
    %c0_66 = arith.constant 0 : index
    %c0_67 = arith.constant 0 : index
    %245 = vector.load %arg9[%c0_66, %c0_67] : memref<128x4xf32, #tpu.memory_space<vmem>>, vector<128x4xf32>
    %cst_68 = arith.constant dense<0.000000e+00> : vector<2x4xf32>
    %246 = tpu.matmul %244, %245, %cst_68 {dimension_numbers = #tpu.dot_dimension_numbers<[1], [0], [0], [1], [0, 0, 1, 1], [], []>} : vector<2x128xf32>, vector<128x4xf32>, vector<2x4xf32> -> vector<2x4xf32>
    %c0_69 = arith.constant 0 : index
    %c0_70 = arith.constant 0 : index
    %247 = vector.load %arg10[%c0_69, %c0_70] : memref<1x4xf32, #tpu.memory_space<vmem>>, vector<1x4xf32>
    %248 = vector.broadcast %247 : vector<1x4xf32> to vector<2x4xf32>
    %249 = arith.addf %246, %248 : vector<2x4xf32>
    %c0_71 = arith.constant 0 : index
    %c0_72 = arith.constant 0 : index
    %250 = vector.load %arg14[%c0_71, %c0_72] : memref<2x4xf32, #tpu.memory_space<vmem>>, vector<2x4xf32>
    tpu.vector_store %arg14[%c0_71, %c0_72], %249 {strides = array<i32>} : memref<2x4xf32, #tpu.memory_space<vmem>>, vector<2x4xf32>,
    %251 = vector.extract_strided_slice %25 {offsets = [0, 128], sizes = [2, 64], strides = [1, 1]} : vector<2x192xf32> to vector<2x64xf32>
    %c0_73 = arith.constant 0 : index
    %c0_74 = arith.constant 0 : index
    %252 = vector.load %arg11[%c0_73, %c0_74] : memref<1x64xf32, #tpu.memory_space<vmem>>, vector<1x64xf32>
    %253 = vector.broadcast %252 : vector<1x64xf32> to vector<2x64xf32>
    %254 = arith.addf %251, %253 : vector<2x64xf32>
    %c0_75 = arith.constant 0 : index
    %c0_76 = arith.constant 0 : index
    %255 = vector.load %arg12[%c0_75, %c0_76] : memref<64x5xf32, #tpu.memory_space<vmem>>, vector<64x5xf32>
    %cst_77 = arith.constant dense<0.000000e+00> : vector<2x5xf32>
    %256 = tpu.matmul %254, %255, %cst_77 {dimension_numbers = #tpu.dot_dimension_numbers<[1], [0], [0], [1], [0, 0, 1, 1], [], []>} : vector<2x64xf32>, vector<64x5xf32>, vector<2x5xf32> -> vector<2x5xf32>
    %c0_78 = arith.constant 0 : index
    %c0_79 = arith.constant 0 : index
    %257 = vector.load %arg13[%c0_78, %c0_79] : memref<1x5xf32, #tpu.memory_space<vmem>>, vector<1x5xf32>
    %258 = vector.broadcast %257 : vector<1x5xf32> to vector<2x5xf32>
    %259 = arith.addf %256, %258 : vector<2x5xf32>
    %c0_80 = arith.constant 0 : index
    %c0_81 = arith.constant 0 : index
    %260 = vector.load %arg15[%c0_80, %c0_81] : memref<2x5xf32, #tpu.memory_space<vmem>>, vector<2x5xf32>
    tpu.vector_store %arg15[%c0_80, %c0_81], %259 {strides = array<i32>} : memref<2x5xf32, #tpu.memory_space<vmem>>, vector<2x5xf32>,
    return
  }
}

</mosaic_0001>

<llo_original>
// kernel: bpm_mt_forward.1
$region0: #{bpm_mt_forward.1}
  #allocation0 [shape = 'u32[]', space=smem, size = 0x4, offset = 0x4, fixed_abs, tag = 'smem constant byte address 0x4 - core index']
  #allocation1 [shape = 'u32[72,128]{1,0:T(1,128)}', space=vmem, size = 0x9000, scoped, tag = 'internal scratch']
  %s0 = inlined_call_operand.vmem [shape: f32[2,8], index: 0, kind: input, shape index: {}]
  %s1 = inlined_call_operand.vmem [shape: f32[2,768], index: 1, kind: input, shape index: {}]
  %s2 = inlined_call_operand.vmem [shape: f32[8,64], index: 2, kind: input, shape index: {}]
  %s3 = inlined_call_operand.vmem [shape: f32[3,16,64], index: 3, kind: input, shape index: {}]
  %s4 = inlined_call_operand.vmem [shape: f32[4,16,64], index: 4, kind: input, shape index: {}]
  %s5 = inlined_call_operand.vmem [shape: f32[4,1,64], index: 5, kind: input, shape index: {}]
  %s6 = inlined_call_operand.vmem [shape: f32[768,192], index: 6, kind: input, shape index: {}]
  %s7 = inlined_call_operand.vmem [shape: f32[16,128], index: 7, kind: input, shape index: {}]
  %s8 = inlined_call_operand.vmem [shape: f32[1,128], index: 8, kind: input, shape index: {}]
  %s9 = inlined_call_operand.vmem [shape: f32[128,4], index: 9, kind: input, shape index: {}]
  %s10 = inlined_call_operand.vmem [shape: f32[1,4], index: 10, kind: input, shape index: {}]
  %s11 = inlined_call_operand.vmem [shape: f32[1,64], index: 11, kind: input, shape index: {}]
  %s12 = inlined_call_operand.vmem [shape: f32[64,5], index: 12, kind: input, shape index: {}]
  %s13 = inlined_call_operand.vmem [shape: f32[1,5], index: 13, kind: input, shape index: {}]
  %s14 = inlined_call_operand.hbm [shape: f32[2,4], index: 14, kind: output, shape index: {0}]
  %s15 = inlined_call_operand.hbm [shape: f32[2,5], index: 15, kind: output, shape index: {1}]
  %16 = xla_tuple %s14, %s15
  %s17 = sld [smem:[#allocation0]]
  $region74: #{bpm_mt_forward.1} parent=0
    _
  %s19 = ssub.s32 1, %s17
  %s20 = scalar_select 0, %s19, %s17
  $region1: #{bpm_mt_forward.1} parent=0
    #allocation2 [shape = 'u8[1024]{0}', space=vmem, size = 0x400, scoped, tag = 'output window, operand 0, single buffered']
    #allocation3 [shape = 's32[1]{0}', space=sflag, size = 0x4, scoped, tag = 'scoped memory for bpm_mt_forward.1']
    #allocation4 [shape = 'u8[1024]{0}', space=vmem, size = 0x400, scoped, tag = 'output window, operand 1, single buffered']
    #allocation5 [shape = 's32[1]{0}', space=sflag, size = 0x4, scoped, tag = 'scoped memory for bpm_mt_forward.1']
    %21 = vsyncpa [#allocation3], 0
    %22 = vsyncpa [#allocation5], 0
    // Predicated region
    $region2: #{bpm_mt_forward.1} parent=1 // pred_check
      _
    $region3: #{bpm_mt_forward.1} parent=1 // pred_check_branch
      %24 = sbr.rel (0) target = $region5
    $region4: #{bpm_mt_forward.1} parent=1 // pred_region
      _
    $region5: #{bpm_mt_forward.1} parent=1 // pred_fallthru
      _
    // Predicated region
    $region6: #{bpm_mt_forward.1} parent=1 // pred_check
      _
    $region7: #{bpm_mt_forward.1} parent=1 // pred_check_branch
      %26 = sbr.rel (0) target = $region9
    $region8: #{bpm_mt_forward.1} parent=1 // pred_region
      _
    $region9: #{bpm_mt_forward.1} parent=1 // pred_fallthru
      _
    // Predicated region
    $region10: #{bpm_mt_forward.1} parent=1 // pred_check
      _
    $region11: #{bpm_mt_forward.1} parent=1 // pred_check_branch
      %28 = sbr.rel (0) target = $region13
    $region12: #{bpm_mt_forward.1} parent=1 // pred_region
      _
    $region13: #{bpm_mt_forward.1} parent=1 // pred_fallthru
      _
    // Predicated region
    $region14: #{bpm_mt_forward.1} parent=1 // pred_check
      _
    $region15: #{bpm_mt_forward.1} parent=1 // pred_check_branch
      %30 = sbr.rel (0) target = $region17
    $region16: #{bpm_mt_forward.1} parent=1 // pred_region
      _
    $region17: #{bpm_mt_forward.1} parent=1 // pred_fallthru
      _
    // Predicated region
    $region18: #{bpm_mt_forward.1} parent=1 // pred_check
      _
    $region19: #{bpm_mt_forward.1} parent=1 // pred_check_branch
      %32 = sbr.rel (0) target = $region21
    $region20: #{bpm_mt_forward.1} parent=1 // pred_region
      _
    $region21: #{bpm_mt_forward.1} parent=1 // pred_fallthru
      _
    // Predicated region
    $region22: #{bpm_mt_forward.1} parent=1 // pred_check
      _
    $region23: #{bpm_mt_forward.1} parent=1 // pred_check_branch
      %34 = sbr.rel (0) target = $region25
    $region24: #{bpm_mt_forward.1} parent=1 // pred_region
      _
    $region25: #{bpm_mt_forward.1} parent=1 // pred_fallthru
      _
    // Predicated region
    $region26: #{bpm_mt_forward.1} parent=1 // pred_check
      _
    $region27: #{bpm_mt_forward.1} parent=1 // pred_check_branch
      %36 = sbr.rel (0) target = $region29
    $region28: #{bpm_mt_forward.1} parent=1 // pred_region
      _
    $region29: #{bpm_mt_forward.1} parent=1 // pred_fallthru
      _
    // Predicated region
    $region30: #{bpm_mt_forward.1} parent=1 // pred_check
      _
    $region31: #{bpm_mt_forward.1} parent=1 // pred_check_branch
      %38 = sbr.rel (0) target = $region33
    $region32: #{bpm_mt_forward.1} parent=1 // pred_region
      _
    $region33: #{bpm_mt_forward.1} parent=1 // pred_fallthru
      _
    // Predicated region
    $region34: #{bpm_mt_forward.1} parent=1 // pred_check
      _
    $region35: #{bpm_mt_forward.1} parent=1 // pred_check_branch
      %40 = sbr.rel (0) target = $region37
    $region36: #{bpm_mt_forward.1} parent=1 // pred_region
      _
    $region37: #{bpm_mt_forward.1} parent=1 // pred_fallthru
      _
    // Predicated region
    $region38: #{bpm_mt_forward.1} parent=1 // pred_check
      _
    $region39: #{bpm_mt_forward.1} parent=1 // pred_check_branch
      %42 = sbr.rel (0) target = $region41
    $region40: #{bpm_mt_forward.1} parent=1 // pred_region
      _
    $region41: #{bpm_mt_forward.1} parent=1 // pred_fallthru
      _
    // Predicated region
    $region42: #{bpm_mt_forward.1} parent=1 // pred_check
      _
    $region43: #{bpm_mt_forward.1} parent=1 // pred_check_branch
      %44 = sbr.rel (0) target = $region45
    $region44: #{bpm_mt_forward.1} parent=1 // pred_region
      _
    $region45: #{bpm_mt_forward.1} parent=1 // pred_fallthru
      _
    // Predicated region
    $region46: #{bpm_mt_forward.1} parent=1 // pred_check
      _
    $region47: #{bpm_mt_forward.1} parent=1 // pred_check_branch
      %46 = sbr.rel (0) target = $region49
    $region48: #{bpm_mt_forward.1} parent=1 // pred_region
      _
    $region49: #{bpm_mt_forward.1} parent=1 // pred_fallthru
      _
    // Predicated region
    $region50: #{bpm_mt_forward.1} parent=1 // pred_check
      _
    $region51: #{bpm_mt_forward.1} parent=1 // pred_check_branch
      %48 = sbr.rel (0) target = $region53
    $region52: #{bpm_mt_forward.1} parent=1 // pred_region
      _
    $region53: #{bpm_mt_forward.1} parent=1 // pred_fallthru
      _
    // Predicated region
    $region54: #{bpm_mt_forward.1} parent=1 // pred_check
      _
    $region55: #{bpm_mt_forward.1} parent=1 // pred_check_branch
      %50 = sbr.rel (0) target = $region57
    $region56: #{bpm_mt_forward.1} parent=1 // pred_region
      _
    $region57: #{bpm_mt_forward.1} parent=1 // pred_fallthru
      _
    %v51 = vlaneseq
    %v52 = vand.u32 %v51, 127
    %vm53 = vcmp.lt.s32.totalorder %v52, 0
    %v54 = vsub.s32 0, %v52
    %v55 = vsel %vm53, %v54, %v52
    %v56 = vshrl.u32 %v55, 4
    %v57 = vand.u32 %v55, 15
    %v58 = vsub.s32 0, %v57
    %v59 = vsel %vm53, %v58, %v57
    %vm60 = vcmp.ne.s32.totalorder %v59, 0
    %vm61 = vcmp.lt.s32.totalorder %v59, 0
    %vm62 = vmand %vm61, %vm60
    %v63 = vadd.s32 %v59, 16
    %v64 = vsel %vm62, %v63, %v59
    %vm65 = vcmp.lt.s32.totalorder %v64, 8
    %vm66 = vcmp.lt.s32.totalorder %v52, 8
    %v67 = vlaneseq
    %v68 = vshrl.u32 %v67, 7
    %v69 = vld [vmem:[%s1] sm:$0xff]
    %v70 = vld [vmem:[%s1 + $0x8] sm:$0xf]
    %v71 = vld [vmem:[%s6] sm:$0xff]
    %v72 = vld [vmem:[%s6 + $0x8] sm:$0xff]
    %v73 = vld [vmem:[%s6 + $0x10] sm:$0xff]
    %v74 = vld [vmem:[%s6 + $0x18] sm:$0xff]
    %v75 = vld [vmem:[%s6 + $0x20] sm:$0xff]
    %v76 = vld [vmem:[%s6 + $0x28] sm:$0xff]
    %v77 = vld [vmem:[%s6 + $0x30] sm:$0xff]
    %v78 = vld [vmem:[%s6 + $0x38] sm:$0xff]
    %v79 = vld [vmem:[%s6 + $0x40] sm:$0xff]
    %v80 = vld [vmem:[%s6 + $0x48] sm:$0xff]
    %v81 = vld [vmem:[%s6 + $0x50] sm:$0xff]
    %v82 = vld [vmem:[%s6 + $0x58] sm:$0xff]
    %v83 = vld [vmem:[%s6 + $0x60] sm:$0xff]
    %v84 = vld [vmem:[%s6 + $0x68] sm:$0xff]
    %v85 = vld [vmem:[%s6 + $0x70] sm:$0xff]
    %v86 = vld [vmem:[%s6 + $0x78] sm:$0xff]
    %v87 = vld [vmem:[%s6 + $0x80] sm:$0xff]
    %v88 = vld [vmem:[%s6 + $0x88] sm:$0xff]
    %v89 = vld [vmem:[%s6 + $0x90] sm:$0xff]
    %v90 = vld [vmem:[%s6 + $0x98] sm:$0xff]
    %v91 = vld [vmem:[%s6 + $0xa0] sm:$0xff]
    %v92 = vld [vmem:[%s6 + $0xa8] sm:$0xff]
    %v93 = vld [vmem:[%s6 + $0xb0] sm:$0xff]
    %v94 = vld [vmem:[%s6 + $0xb8] sm:$0xff]
    %v95 = vld [vmem:[%s6 + $0xc0] sm:$0xff]
    %v96 = vld [vmem:[%s6 + $0xc8] sm:$0xff]
    %v97 = vld [vmem:[%s6 + $0xd0] sm:$0xff]
    %v98 = vld [vmem:[%s6 + $0xd8] sm:$0xff]
    %v99 = vld [vmem:[%s6 + $0xe0] sm:$0xff]
    %v100 = vld [vmem:[%s6 + $0xe8] sm:$0xff]
    %v101 = vld [vmem:[%s6 + $0xf0] sm:$0xff]
    %v102 = vld [vmem:[%s6 + $0xf8] sm:$0xff]
    %v103 = vld [vmem:[%s6 + $0x100] sm:$0xff]
    %v104 = vld [vmem:[%s6 + $0x108] sm:$0xff]
    %v105 = vld [vmem:[%s6 + $0x110] sm:$0xff]
    %v106 = vld [vmem:[%s6 + $0x118] sm:$0xff]
    %v107 = vld [vmem:[%s6 + $0x120] sm:$0xff]
    %v108 = vld [vmem:[%s6 + $0x128] sm:$0xff]
    %v109 = vld [vmem:[%s6 + $0x130] sm:$0xff]
    %v110 = vld [vmem:[%s6 + $0x138] sm:$0xff]
    %v111 = vld [vmem:[%s6 + $0x140] sm:$0xff]
    %v112 = vld [vmem:[%s6 + $0x148] sm:$0xff]
    %v113 = vld [vmem:[%s6 + $0x150] sm:$0xff]
    %v114 = vld [vmem:[%s6 + $0x158] sm:$0xff]
    %v115 = vld [vmem:[%s6 + $0x160] sm:$0xff]
    %v116 = vld [vmem:[%s6 + $0x168] sm:$0xff]
    %v117 = vld [vmem:[%s6 + $0x170] sm:$0xff]
    %v118 = vld [vmem:[%s6 + $0x178] sm:$0xff]
    %v119 = vld [vmem:[%s6 + $0x180] sm:$0xff]
    %v120 = vld [vmem:[%s6 + $0x188] sm:$0xff]
    %v121 = vld [vmem:[%s6 + $0x190] sm:$0xff]
    %v122 = vld [vmem:[%s6 + $0x198] sm:$0xff]
    %v123 = vld [vmem:[%s6 + $0x1a0] sm:$0xff]
    %v124 = vld [vmem:[%s6 + $0x1a8] sm:$0xff]
    %v125 = vld [vmem:[%s6 + $0x1b0] sm:$0xff]
    %v126 = vld [vmem:[%s6 + $0x1b8] sm:$0xff]
    %v127 = vld [vmem:[%s6 + $0x1c0] sm:$0xff]
    %v128 = vld [vmem:[%s6 + $0x1c8] sm:$0xff]
    %v129 = vld [vmem:[%s6 + $0x1d0] sm:$0xff]
    %v130 = vld [vmem:[%s6 + $0x1d8] sm:$0xff]
    %v131 = vld [vmem:[%s6 + $0x1e0] sm:$0xff]
    %v132 = vld [vmem:[%s6 + $0x1e8] sm:$0xff]
    %v133 = vld [vmem:[%s6 + $0x1f0] sm:$0xff]
    %v134 = vld [vmem:[%s6 + $0x1f8] sm:$0xff]
    %v135 = vld [vmem:[%s6 + $0x200] sm:$0xff]
    %v136 = vld [vmem:[%s6 + $0x208] sm:$0xff]
    %v137 = vld [vmem:[%s6 + $0x210] sm:$0xff]
    %v138 = vld [vmem:[%s6 + $0x218] sm:$0xff]
    %v139 = vld [vmem:[%s6 + $0x220] sm:$0xff]
    %v140 = vld [vmem:[%s6 + $0x228] sm:$0xff]
    %v141 = vld [vmem:[%s6 + $0x230] sm:$0xff]
    %v142 = vld [vmem:[%s6 + $0x238] sm:$0xff]
    %v143 = vld [vmem:[%s6 + $0x240] sm:$0xff]
    %v144 = vld [vmem:[%s6 + $0x248] sm:$0xff]
    %v145 = vld [vmem:[%s6 + $0x250] sm:$0xff]
    %v146 = vld [vmem:[%s6 + $0x258] sm:$0xff]
    %v147 = vld [vmem:[%s6 + $0x260] sm:$0xff]
    %v148 = vld [vmem:[%s6 + $0x268] sm:$0xff]
    %v149 = vld [vmem:[%s6 + $0x270] sm:$0xff]
    %v150 = vld [vmem:[%s6 + $0x278] sm:$0xff]
    %v151 = vld [vmem:[%s6 + $0x280] sm:$0xff]
    %v152 = vld [vmem:[%s6 + $0x288] sm:$0xff]
    %v153 = vld [vmem:[%s6 + $0x290] sm:$0xff]
    %v154 = vld [vmem:[%s6 + $0x298] sm:$0xff]
    %v155 = vld [vmem:[%s6 + $0x2a0] sm:$0xff]
    %v156 = vld [vmem:[%s6 + $0x2a8] sm:$0xff]
    %v157 = vld [vmem:[%s6 + $0x2b0] sm:$0xff]
    %v158 = vld [vmem:[%s6 + $0x2b8] sm:$0xff]
    %v159 = vld [vmem:[%s6 + $0x2c0] sm:$0xff]
    %v160 = vld [vmem:[%s6 + $0x2c8] sm:$0xff]
    %v161 = vld [vmem:[%s6 + $0x2d0] sm:$0xff]
    %v162 = vld [vmem:[%s6 + $0x2d8] sm:$0xff]
    %v163 = vld [vmem:[%s6 + $0x2e0] sm:$0xff]
    %v164 = vld [vmem:[%s6 + $0x2e8] sm:$0xff]
    %v165 = vld [vmem:[%s6 + $0x2f0] sm:$0xff]
    %v166 = vld [vmem:[%s6 + $0x2f8] sm:$0xff]
    %v167 = vld [vmem:[%s6 + $0x300] sm:$0xff]
    %v168 = vld [vmem:[%s6 + $0x308] sm:$0xff]
    %v169 = vld [vmem:[%s6 + $0x310] sm:$0xff]
    %v170 = vld [vmem:[%s6 + $0x318] sm:$0xff]
    %v171 = vld [vmem:[%s6 + $0x320] sm:$0xff]
    %v172 = vld [vmem:[%s6 + $0x328] sm:$0xff]
    %v173 = vld [vmem:[%s6 + $0x330] sm:$0xff]
    %v174 = vld [vmem:[%s6 + $0x338] sm:$0xff]
    %v175 = vld [vmem:[%s6 + $0x340] sm:$0xff]
    %v176 = vld [vmem:[%s6 + $0x348] sm:$0xff]
    %v177 = vld [vmem:[%s6 + $0x350] sm:$0xff]
    %v178 = vld [vmem:[%s6 + $0x358] sm:$0xff]
    %v179 = vld [vmem:[%s6 + $0x360] sm:$0xff]
    %v180 = vld [vmem:[%s6 + $0x368] sm:$0xff]
    %v181 = vld [vmem:[%s6 + $0x370] sm:$0xff]
    %v182 = vld [vmem:[%s6 + $0x378] sm:$0xff]
    %v183 = vld [vmem:[%s6 + $0x380] sm:$0xff]
    %v184 = vld [vmem:[%s6 + $0x388] sm:$0xff]
    %v185 = vld [vmem:[%s6 + $0x390] sm:$0xff]
    %v186 = vld [vmem:[%s6 + $0x398] sm:$0xff]
    %v187 = vld [vmem:[%s6 + $0x3a0] sm:$0xff]
    %v188 = vld [vmem:[%s6 + $0x3a8] sm:$0xff]
    %v189 = vld [vmem:[%s6 + $0x3b0] sm:$0xff]
    %v190 = vld [vmem:[%s6 + $0x3b8] sm:$0xff]
    %v191 = vld [vmem:[%s6 + $0x3c0] sm:$0xff]
    %v192 = vld [vmem:[%s6 + $0x3c8] sm:$0xff]
    %v193 = vld [vmem:[%s6 + $0x3d0] sm:$0xff]
    %v194 = vld [vmem:[%s6 + $0x3d8] sm:$0xff]
    %v195 = vld [vmem:[%s6 + $0x3e0] sm:$0xff]
    %v196 = vld [vmem:[%s6 + $0x3e8] sm:$0xff]
    %v197 = vld [vmem:[%s6 + $0x3f0] sm:$0xff]
    %v198 = vld [vmem:[%s6 + $0x3f8] sm:$0xff]
    %v199 = vld [vmem:[%s6 + $0x400] sm:$0xff]
    %v200 = vld [vmem:[%s6 + $0x408] sm:$0xff]
    %v201 = vld [vmem:[%s6 + $0x410] sm:$0xff]
    %v202 = vld [vmem:[%s6 + $0x418] sm:$0xff]
    %v203 = vld [vmem:[%s6 + $0x420] sm:$0xff]
    %v204 = vld [vmem:[%s6 + $0x428] sm:$0xff]
    %v205 = vld [vmem:[%s6 + $0x430] sm:$0xff]
    %v206 = vld [vmem:[%s6 + $0x438] sm:$0xff]
    %v207 = vld [vmem:[%s6 + $0x440] sm:$0xff]
    %v208 = vld [vmem:[%s6 + $0x448] sm:$0xff]
    %v209 = vld [vmem:[%s6 + $0x450] sm:$0xff]
    %v210 = vld [vmem:[%s6 + $0x458] sm:$0xff]
    %v211 = vld [vmem:[%s6 + $0x460] sm:$0xff]
    %v212 = vld [vmem:[%s6 + $0x468] sm:$0xff]
    %v213 = vld [vmem:[%s6 + $0x470] sm:$0xff]
    %v214 = vld [vmem:[%s6 + $0x478] sm:$0xff]
    %v215 = vld [vmem:[%s6 + $0x480] sm:$0xff]
    %v216 = vld [vmem:[%s6 + $0x488] sm:$0xff]
    %v217 = vld [vmem:[%s6 + $0x490] sm:$0xff]
    %v218 = vld [vmem:[%s6 + $0x498] sm:$0xff]
    %v219 = vld [vmem:[%s6 + $0x4a0] sm:$0xff]
    %v220 = vld [vmem:[%s6 + $0x4a8] sm:$0xff]
    %v221 = vld [vmem:[%s6 + $0x4b0] sm:$0xff]
    %v222 = vld [vmem:[%s6 + $0x4b8] sm:$0xff]
    %v223 = vld [vmem:[%s6 + $0x4c0] sm:$0xff]
    %v224 = vld [vmem:[%s6 + $0x4c8] sm:$0xff]
    %v225 = vld [vmem:[%s6 + $0x4d0] sm:$0xff]
    %v226 = vld [vmem:[%s6 + $0x4d8] sm:$0xff]
    %v227 = vld [vmem:[%s6 + $0x4e0] sm:$0xff]
    %v228 = vld [vmem:[%s6 + $0x4e8] sm:$0xff]
    %v229 = vld [vmem:[%s6 + $0x4f0] sm:$0xff]
    %v230 = vld [vmem:[%s6 + $0x4f8] sm:$0xff]
    %v231 = vld [vmem:[%s6 + $0x500] sm:$0xff]
    %v232 = vld [vmem:[%s6 + $0x508] sm:$0xff]
    %v233 = vld [vmem:[%s6 + $0x510] sm:$0xff]
    %v234 = vld [vmem:[%s6 + $0x518] sm:$0xff]
    %v235 = vld [vmem:[%s6 + $0x520] sm:$0xff]
    %v236 = vld [vmem:[%s6 + $0x528] sm:$0xff]
    %v237 = vld [vmem:[%s6 + $0x530] sm:$0xff]
    %v238 = vld [vmem:[%s6 + $0x538] sm:$0xff]
    %v239 = vld [vmem:[%s6 + $0x540] sm:$0xff]
    %v240 = vld [vmem:[%s6 + $0x548] sm:$0xff]
    %v241 = vld [vmem:[%s6 + $0x550] sm:$0xff]
    %v242 = vld [vmem:[%s6 + $0x558] sm:$0xff]
    %v243 = vld [vmem:[%s6 + $0x560] sm:$0xff]
    %v244 = vld [vmem:[%s6 + $0x568] sm:$0xff]
    %v245 = vld [vmem:[%s6 + $0x570] sm:$0xff]
    %v246 = vld [vmem:[%s6 + $0x578] sm:$0xff]
    %v247 = vld [vmem:[%s6 + $0x580] sm:$0xff]
    %v248 = vld [vmem:[%s6 + $0x588] sm:$0xff]
    %v249 = vld [vmem:[%s6 + $0x590] sm:$0xff]
    %v250 = vld [vmem:[%s6 + $0x598] sm:$0xff]
    %v251 = vld [vmem:[%s6 + $0x5a0] sm:$0xff]
    %v252 = vld [vmem:[%s6 + $0x5a8] sm:$0xff]
    %v253 = vld [vmem:[%s6 + $0x5b0] sm:$0xff]
    %v254 = vld [vmem:[%s6 + $0x5b8] sm:$0xff]
    %v255 = vld [vmem:[%s6 + $0x5c0] sm:$0xff]
    %v256 = vld [vmem:[%s6 + $0x5c8] sm:$0xff]
    %v257 = vld [vmem:[%s6 + $0x5d0] sm:$0xff]
    %v258 = vld [vmem:[%s6 + $0x5d8] sm:$0xff]
    %v259 = vld [vmem:[%s6 + $0x5e0] sm:$0xff]
    %v260 = vld [vmem:[%s6 + $0x5e8] sm:$0xff]
    %v261 = vld [vmem:[%s6 + $0x5f0] sm:$0xff]
    %v262 = vld [vmem:[%s6 + $0x5f8] sm:$0xff]
    %265 = vst [vmem:[#allocation1] ss:$4 sm:$0xff] %v69
    %s266 = scalar_lea.vmem [#allocation1], 32
    %267 = vst [vmem:[%s266] ss:$4 sm:$0xff] %v70
    %v268 = vld.sshfl [vmem:[#allocation1] sm:$0xff pattern:$0x73625140]
    %v269 = vld.sshfl [vmem:[#allocation1 + $0x8] sm:$0xff pattern:$0x73625140]
    %v270 = vld.sshfl [vmem:[#allocation1 + $0x10] sm:$0xff pattern:$0x73625140]
    %v271 = vld.sshfl [vmem:[#allocation1 + $0x18] sm:$0xff pattern:$0x73625140]
    %v272 = vld.sshfl [vmem:[#allocation1 + $0x20] sm:$0xff pattern:$0x73625140]
    %v273 = vld.sshfl [vmem:[#allocation1 + $0x28] sm:$0xff pattern:$0x73625140]
    %280 = vmatpush.msra.mxu0 %v101
    %281 = vmatpush.msra.mxu0 %v99
    %282 = vmatpush.msra.mxu0 %v97
    %283 = vmatpush.msra.mxu0 %v95
    %284 = vmatpush.msra.mxu0 %v93
    %285 = vmatpush.msra.mxu0 %v91
    %286 = vmatpush.msra.mxu0 %v89
    %287 = vmatpush.msra.mxu0 %v87
    %288 = vmatpush.msra.mxu0 %v85
    %289 = vmatpush.msra.mxu0 %v83
    %290 = vmatpush.msra.mxu0 %v81
    %291 = vmatpush.msra.mxu0 %v79
    %292 = vmatpush.msra.mxu0 %v77
    %293 = vmatpush.msra.mxu0 %v75
    %294 = vmatpush.msra.mxu0 %v73
    %295 = vmatpush.msra.mxu0 %v71
    %296 = vmatmul.f32.gmra.mxu0 %v268
    %v297 = vpop.f32.mrf.mxu0
    %v298 = vadd.f32 0.0, %v297
    %299 = vdwg.mxu0
    %300 = vmatpush.msra.mxu0 %v133
    %301 = vmatpush.msra.mxu0 %v131
    %302 = vmatpush.msra.mxu0 %v129
    %303 = vmatpush.msra.mxu0 %v127
    %304 = vmatpush.msra.mxu0 %v125
    %305 = vmatpush.msra.mxu0 %v123
    %306 = vmatpush.msra.mxu0 %v121
    %307 = vmatpush.msra.mxu0 %v119
    %308 = vmatpush.msra.mxu0 %v117
    %309 = vmatpush.msra.mxu0 %v115
    %310 = vmatpush.msra.mxu0 %v113
    %311 = vmatpush.msra.mxu0 %v111
    %312 = vmatpush.msra.mxu0 %v109
    %313 = vmatpush.msra.mxu0 %v107
    %314 = vmatpush.msra.mxu0 %v105
    %315 = vmatpush.msra.mxu0 %v103
    %316 = vmatmul.f32.gmra.mxu0 %v269
    %v317 = vpop.f32.mrf.mxu0
    %v318 = vadd.f32 %v298, %v317
    %319 = vdwg.mxu0
    %320 = vmatpush.msra.mxu0 %v165
    %321 = vmatpush.msra.mxu0 %v163
    %322 = vmatpush.msra.mxu0 %v161
    %323 = vmatpush.msra.mxu0 %v159
    %324 = vmatpush.msra.mxu0 %v157
    %325 = vmatpush.msra.mxu0 %v155
    %326 = vmatpush.msra.mxu0 %v153
    %327 = vmatpush.msra.mxu0 %v151
    %328 = vmatpush.msra.mxu0 %v149
    %329 = vmatpush.msra.mxu0 %v147
    %330 = vmatpush.msra.mxu0 %v145
    %331 = vmatpush.msra.mxu0 %v143
    %332 = vmatpush.msra.mxu0 %v141
    %333 = vmatpush.msra.mxu0 %v139
    %334 = vmatpush.msra.mxu0 %v137
    %335 = vmatpush.msra.mxu0 %v135
    %336 = vmatmul.f32.gmra.mxu0 %v270
    %v337 = vpop.f32.mrf.mxu0
    %v338 = vadd.f32 %v318, %v337
    %339 = vdwg.mxu0
    %340 = vmatpush.msra.mxu0 %v197
    %341 = vmatpush.msra.mxu0 %v195
    %342 = vmatpush.msra.mxu0 %v193
    %343 = vmatpush.msra.mxu0 %v191
    %344 = vmatpush.msra.mxu0 %v189
    %345 = vmatpush.msra.mxu0 %v187
    %346 = vmatpush.msra.mxu0 %v185
    %347 = vmatpush.msra.mxu0 %v183
    %348 = vmatpush.msra.mxu0 %v181
    %349 = vmatpush.msra.mxu0 %v179
    %350 = vmatpush.msra.mxu0 %v177
    %351 = vmatpush.msra.mxu0 %v175
    %352 = vmatpush.msra.mxu0 %v173
    %353 = vmatpush.msra.mxu0 %v171
    %354 = vmatpush.msra.mxu0 %v169
    %355 = vmatpush.msra.mxu0 %v167
    %356 = vmatmul.f32.gmra.mxu0 %v271
    %v357 = vpop.f32.mrf.mxu0
    %v358 = vadd.f32 %v338, %v357
    %359 = vdwg.mxu0
    %360 = vmatpush.msra.mxu0 %v229
    %361 = vmatpush.msra.mxu0 %v227
    %362 = vmatpush.msra.mxu0 %v225
    %363 = vmatpush.msra.mxu0 %v223
    %364 = vmatpush.msra.mxu0 %v221
    %365 = vmatpush.msra.mxu0 %v219
    %366 = vmatpush.msra.mxu0 %v217
    %367 = vmatpush.msra.mxu0 %v215
    %368 = vmatpush.msra.mxu0 %v213
    %369 = vmatpush.msra.mxu0 %v211
    %370 = vmatpush.msra.mxu0 %v209
    %371 = vmatpush.msra.mxu0 %v207
    %372 = vmatpush.msra.mxu0 %v205
    %373 = vmatpush.msra.mxu0 %v203
    %374 = vmatpush.msra.mxu0 %v201
    %375 = vmatpush.msra.mxu0 %v199
    %376 = vmatmul.f32.gmra.mxu0 %v272
    %v377 = vpop.f32.mrf.mxu0
    %v378 = vadd.f32 %v358, %v377
    %379 = vdwg.mxu0
    %380 = vmatpush.msra.mxu0 %v261
    %381 = vmatpush.msra.mxu0 %v259
    %382 = vmatpush.msra.mxu0 %v257
    %383 = vmatpush.msra.mxu0 %v255
    %384 = vmatpush.msra.mxu0 %v253
    %385 = vmatpush.msra.mxu0 %v251
    %386 = vmatpush.msra.mxu0 %v249
    %387 = vmatpush.msra.mxu0 %v247
    %388 = vmatpush.msra.mxu0 %v245
    %389 = vmatpush.msra.mxu0 %v243
    %390 = vmatpush.msra.mxu0 %v241
    %391 = vmatpush.msra.mxu0 %v239
    %392 = vmatpush.msra.mxu0 %v237
    %393 = vmatpush.msra.mxu0 %v235
    %394 = vmatpush.msra.mxu0 %v233
    %395 = vmatpush.msra.mxu0 %v231
    %396 = vmatmul.f32.gmra.mxu0 %v273
    %v397 = vpop.f32.mrf.mxu0
    %v398 = vadd.f32 %v378, %v397
    %399 = vdwg.mxu0
    %400 = vmatpush.msra.mxu0 %v102
    %401 = vmatpush.msra.mxu0 %v100
    %402 = vmatpush.msra.mxu0 %v98
    %403 = vmatpush.msra.mxu0 %v96
    %404 = vmatpush.msra.mxu0 %v94
    %405 = vmatpush.msra.mxu0 %v92
    %406 = vmatpush.msra.mxu0 %v90
    %407 = vmatpush.msra.mxu0 %v88
    %408 = vmatpush.msra.mxu0 %v86
    %409 = vmatpush.msra.mxu0 %v84
    %410 = vmatpush.msra.mxu0 %v82
    %411 = vmatpush.msra.mxu0 %v80
    %412 = vmatpush.msra.mxu0 %v78
    %413 = vmatpush.msra.mxu0 %v76
    %414 = vmatpush.msra.mxu0 %v74
    %415 = vmatpush.msra.mxu0 %v72
    %416 = vmatmul.f32.gmra.mxu0 %v268
    %v417 = vpop.f32.mrf.mxu0
    %v418 = vadd.f32 0.0, %v417
    %419 = vdwg.mxu0
    %420 = vmatpush.msra.mxu0 %v134
    %421 = vmatpush.msra.mxu0 %v132
    %422 = vmatpush.msra.mxu0 %v130
    %423 = vmatpush.msra.mxu0 %v128
    %424 = vmatpush.msra.mxu0 %v126
    %425 = vmatpush.msra.mxu0 %v124
    %426 = vmatpush.msra.mxu0 %v122
    %427 = vmatpush.msra.mxu0 %v120
    %428 = vmatpush.msra.mxu0 %v118
    %429 = vmatpush.msra.mxu0 %v116
    %430 = vmatpush.msra.mxu0 %v114
    %431 = vmatpush.msra.mxu0 %v112
    %432 = vmatpush.msra.mxu0 %v110
    %433 = vmatpush.msra.mxu0 %v108
    %434 = vmatpush.msra.mxu0 %v106
    %435 = vmatpush.msra.mxu0 %v104
    %436 = vmatmul.f32.gmra.mxu0 %v269
    %v437 = vpop.f32.mrf.mxu0
    %v438 = vadd.f32 %v418, %v437
    %439 = vdwg.mxu0
    %440 = vmatpush.msra.mxu0 %v166
    %441 = vmatpush.msra.mxu0 %v164
    %442 = vmatpush.msra.mxu0 %v162
    %443 = vmatpush.msra.mxu0 %v160
    %444 = vmatpush.msra.mxu0 %v158
    %445 = vmatpush.msra.mxu0 %v156
    %446 = vmatpush.msra.mxu0 %v154
    %447 = vmatpush.msra.mxu0 %v152
    %448 = vmatpush.msra.mxu0 %v150
    %449 = vmatpush.msra.mxu0 %v148
    %450 = vmatpush.msra.mxu0 %v146
    %451 = vmatpush.msra.mxu0 %v144
    %452 = vmatpush.msra.mxu0 %v142
    %453 = vmatpush.msra.mxu0 %v140
    %454 = vmatpush.msra.mxu0 %v138
    %455 = vmatpush.msra.mxu0 %v136
    %456 = vmatmul.f32.gmra.mxu0 %v270
    %v457 = vpop.f32.mrf.mxu0
    %v458 = vadd.f32 %v438, %v457
    %459 = vdwg.mxu0
    %460 = vmatpush.msra.mxu0 %v198
    %461 = vmatpush.msra.mxu0 %v196
    %462 = vmatpush.msra.mxu0 %v194
    %463 = vmatpush.msra.mxu0 %v192
    %464 = vmatpush.msra.mxu0 %v190
    %465 = vmatpush.msra.mxu0 %v188
    %466 = vmatpush.msra.mxu0 %v186
    %467 = vmatpush.msra.mxu0 %v184
    %468 = vmatpush.msra.mxu0 %v182
    %469 = vmatpush.msra.mxu0 %v180
    %470 = vmatpush.msra.mxu0 %v178
    %471 = vmatpush.msra.mxu0 %v176
    %472 = vmatpush.msra.mxu0 %v174
    %473 = vmatpush.msra.mxu0 %v172
    %474 = vmatpush.msra.mxu0 %v170
    %475 = vmatpush.msra.mxu0 %v168
    %476 = vmatmul.f32.gmra.mxu0 %v271
    %v477 = vpop.f32.mrf.mxu0
    %v478 = vadd.f32 %v458, %v477
    %479 = vdwg.mxu0
    %480 = vmatpush.msra.mxu0 %v230
    %481 = vmatpush.msra.mxu0 %v228
    %482 = vmatpush.msra.mxu0 %v226
    %483 = vmatpush.msra.mxu0 %v224
    %484 = vmatpush.msra.mxu0 %v222
    %485 = vmatpush.msra.mxu0 %v220
    %486 = vmatpush.msra.mxu0 %v218
    %487 = vmatpush.msra.mxu0 %v216
    %488 = vmatpush.msra.mxu0 %v214
    %489 = vmatpush.msra.mxu0 %v212
    %490 = vmatpush.msra.mxu0 %v210
    %491 = vmatpush.msra.mxu0 %v208
    %492 = vmatpush.msra.mxu0 %v206
    %493 = vmatpush.msra.mxu0 %v204
    %494 = vmatpush.msra.mxu0 %v202
    %495 = vmatpush.msra.mxu0 %v200
    %496 = vmatmul.f32.gmra.mxu0 %v272
    %v497 = vpop.f32.mrf.mxu0
    %v498 = vadd.f32 %v478, %v497
    %499 = vdwg.mxu0
    %500 = vmatpush.msra.mxu0 %v262
    %501 = vmatpush.msra.mxu0 %v260
    %502 = vmatpush.msra.mxu0 %v258
    %503 = vmatpush.msra.mxu0 %v256
    %504 = vmatpush.msra.mxu0 %v254
    %505 = vmatpush.msra.mxu0 %v252
    %506 = vmatpush.msra.mxu0 %v250
    %507 = vmatpush.msra.mxu0 %v248
    %508 = vmatpush.msra.mxu0 %v246
    %509 = vmatpush.msra.mxu0 %v244
    %510 = vmatpush.msra.mxu0 %v242
    %511 = vmatpush.msra.mxu0 %v240
    %512 = vmatpush.msra.mxu0 %v238
    %513 = vmatpush.msra.mxu0 %v236
    %514 = vmatpush.msra.mxu0 %v234
    %515 = vmatpush.msra.mxu0 %v232
    %516 = vmatmul.f32.gmra.mxu0 %v273
    %v517 = vpop.f32.mrf.mxu0
    %v518 = vadd.f32 %v498, %v517
    %519 = vdwg.mxu0
    %v520 = vld [vmem:[%s0] sm:$0x3]
    %v521 = vld [vmem:[%s2] sm:$0xff]
    %v522 = vld [vmem:[%s4] sm:$0xff]
    %v523 = vld [vmem:[%s4 + $0x8] sm:$0xff]
    %v524 = vld [vmem:[%s5] sm:$0x1]
    %v526 = vperm.slane %v524, 0
    %vm528 = vcmask 64512
    %v530 = vsel %vm528, %v520, 0
    %532 = vmatpush.msra.mxu0 0.0
    %533 = vmatpush.msra.mxu0 0.0
    %534 = vmatpush.msra.mxu0 0.0
    %535 = vmatpush.msra.mxu0 0.0
    %536 = vmatpush.msra.mxu0 0.0
    %537 = vmatpush.msra.mxu0 0.0
    %538 = vmatpush.msra.mxu0 0.0
    %539 = vmatpush.msra.mxu0 0.0
    %540 = vmatpush.msra.mxu0 0.0
    %541 = vmatpush.msra.mxu0 0.0
    %542 = vmatpush.msra.mxu0 0.0
    %543 = vmatpush.msra.mxu0 0.0
    %544 = vmatpush.msra.mxu0 0.0
    %545 = vmatpush.msra.mxu0 0.0
    %546 = vmatpush.msra.mxu0 0.0
    %547 = vmatpush.msra.mxu0 %v521
    %548 = vmatmul.f32.gmra.mxu0 %v530
    %v549 = vpop.f32.mrf.mxu0
    %v550 = vadd.f32 %v526, %v549
    %551 = vdwg.mxu0
    %v553 = vrot.slane %v550, 1
    %v555 = vsel %vm65, %v550, %v553
    %v556 = vrot.slane %v550, 7
    %v558 = vsel %vm65, %v550, %v556
    %v559 = vxor.u32 %v555, 2147483648
    %v560 = vmul.f32 %v559, 1.442695
    %v561 = vpow.pop %v560
    %v562 = vadd.f32 %v561, 1.0
    %v563 = vrcp.pop %v562
    %v564 = vmul.f32 %v562, %v563
    %v565 = vsub.f32 1.0, %v564
    %v566 = vmul.f32 %v563, %v565
    %v567 = vadd.f32 %v563, %v566
    %vm568 = vweird.f32 %v562
    %vm569 = vweird.f32 %v563
    %vm570 = vmor %vm568, %vm569
    %v571 = vsel %vm570, %v563, %v567
    %v572 = vand.u32 2147483647, %v562
    %vm573 = vcmp.eq.f32.partialorder %v572, 8.507059e+37
    %v574 = vand.u32 %v562, 2147483648
    %v575 = vor.u32 1.1754944e-38, %v574
    %v576 = vsel %vm573, %v575, %v571
    %v577 = vmul.f32 1.0, %v576
    %v578 = vtanh.pop %v555
    %580 = vrot.lane.b32.xlu0 %v578, 96
    %v581 = vpop.permute.xlu0 %580
    %v583 = vmul.f32 %v577, %v581
    %v584 = vtanh.pop %v583
    %586 = vrot.lane.b32.xlu0 %v584, 48
    %v587 = vpop.permute.xlu0 %586
    %v589 = vmul.f32 %v577, %v587
    %591 = vrot.lane.b32.xlu0 %v589, 80
    %v592 = vpop.permute.xlu0 %591
    %vm593 = vcmask 130048
    %v594 = vsel %vm593, %v592, 0
    %596 = vmatpush.msra.mxu0 0.0
    %597 = vmatpush.msra.mxu0 0.0
    %598 = vmatpush.msra.mxu0 0.0
    %599 = vmatpush.msra.mxu0 0.0
    %600 = vmatpush.msra.mxu0 0.0
    %601 = vmatpush.msra.mxu0 0.0
    %602 = vmatpush.msra.mxu0 0.0
    %603 = vmatpush.msra.mxu0 0.0
    %604 = vmatpush.msra.mxu0 0.0
    %605 = vmatpush.msra.mxu0 0.0
    %606 = vmatpush.msra.mxu0 0.0
    %607 = vmatpush.msra.mxu0 0.0
    %608 = vmatpush.msra.mxu0 0.0
    %609 = vmatpush.msra.mxu0 0.0
    %610 = vmatpush.msra.mxu0 %v523
    %611 = vmatpush.msra.mxu0 %v522
    %612 = vmatmul.f32.gmra.mxu0 %v594
    %v613 = vpop.f32.mrf.mxu0
    %v614 = vadd.f32 0.0, %v613
    %615 = vdwg.mxu0
    %v617 = vrot.slane %v614, 7
    %v619 = vadd.f32 %v558, %v617
    %v620 = vxor.u32 %v619, 2147483648
    %v621 = vmul.f32 %v620, 1.442695
    %v622 = vpow.pop %v621
    %v623 = vadd.f32 %v622, 1.0
    %v624 = vrcp.pop %v623
    %v625 = vmul.f32 %v623, %v624
    %v626 = vsub.f32 1.0, %v625
    %v627 = vmul.f32 %v624, %v626
    %v628 = vadd.f32 %v624, %v627
    %vm629 = vweird.f32 %v623
    %vm630 = vweird.f32 %v624
    %vm631 = vmor %vm629, %vm630
    %v632 = vsel %vm631, %v624, %v628
    %v633 = vand.u32 2147483647, %v623
    %vm634 = vcmp.eq.f32.partialorder %v633, 8.507059e+37
    %v635 = vand.u32 %v623, 2147483648
    %v636 = vor.u32 1.1754944e-38, %v635
    %v637 = vsel %vm634, %v636, %v632
    %v638 = vmul.f32 1.0, %v637
    %v639 = vtanh.pop %v619
    %v641 = vrot.slane %v583, 7
    %642 = vrot.lane.b32.xlu0 %v641, 16
    %v643 = vpop.permute.xlu0 %642
    %v645 = vmul.f32 %v638, %v643
    %647 = vrot.lane.b32.xlu0 %v639, 96
    %v648 = vpop.permute.xlu0 %647
    %v650 = vmul.f32 %v638, %v648
    %652 = vrot.lane.b32.xlu0 %v650, 16
    %v653 = vpop.permute.xlu0 %652
    %v655 = vadd.f32 %v645, %v653
    %v656 = vtanh.pop %v655
    %658 = vrot.lane.b32.xlu0 %v656, 32
    %v659 = vpop.permute.xlu0 %658
    %v661 = vmul.f32 %v638, %v659
    %v664 = vrot.slane %v661, 1
    %665 = vrot.lane.b32.xlu0 %v664, 80
    %v666 = vpop.permute.xlu0 %665
    %v668 = vsel %vm66, %v592, %v666
    %v669 = vsel %vm66, %v666, %v592
    %v670 = vperm.slane %v668, 0
    %vm671 = vcmp.eq.s32.totalorder %v68, 1
    %v672 = vperm.slane %v669, 0
    %v673 = vsel %vm671, %v672, %v670
    %v674 = vld [vmem:[%s3] sm:$0xff]
    %v675 = vld [vmem:[%s3 + $0x8] sm:$0xff]
    %s676 = scalar_lea.vmem %s4, 16
    %v677 = vld [vmem:[%s676] sm:$0xff]
    %v678 = vld [vmem:[%s676 + $0x8] sm:$0xff]
    %s679 = scalar_lea.vmem %s5, 1
    %v680 = vld [vmem:[%s679] sm:$0x1]
    %v682 = vperm.slane %v680, 0
    %v685 = vsel %vm593, %v673, 0
    %687 = vmatpush.msra.mxu0 0.0
    %688 = vmatpush.msra.mxu0 0.0
    %689 = vmatpush.msra.mxu0 0.0
    %690 = vmatpush.msra.mxu0 0.0
    %691 = vmatpush.msra.mxu0 0.0
    %692 = vmatpush.msra.mxu0 0.0
    %693 = vmatpush.msra.mxu0 0.0
    %694 = vmatpush.msra.mxu0 0.0
    %695 = vmatpush.msra.mxu0 0.0
    %696 = vmatpush.msra.mxu0 0.0
    %697 = vmatpush.msra.mxu0 0.0
    %698 = vmatpush.msra.mxu0 0.0
    %699 = vmatpush.msra.mxu0 0.0
    %700 = vmatpush.msra.mxu0 0.0
    %701 = vmatpush.msra.mxu0 %v675
    %702 = vmatpush.msra.mxu0 %v674
    %703 = vmatmul.f32.gmra.mxu0 %v685
    %v704 = vpop.f32.mrf.mxu0
    %v705 = vadd.f32 %v682, %v704
    %706 = vdwg.mxu0
    %v708 = vrot.slane %v705, 1
    %v710 = vsel %vm65, %v705, %v708
    %v711 = vrot.slane %v705, 7
    %v713 = vsel %vm65, %v705, %v711
    %v714 = vxor.u32 %v710, 2147483648
    %v715 = vmul.f32 %v714, 1.442695
    %v716 = vpow.pop %v715
    %v717 = vadd.f32 %v716, 1.0
    %v718 = vrcp.pop %v717
    %v719 = vmul.f32 %v717, %v718
    %v720 = vsub.f32 1.0, %v719
    %v721 = vmul.f32 %v718, %v720
    %v722 = vadd.f32 %v718, %v721
    %vm723 = vweird.f32 %v717
    %vm724 = vweird.f32 %v718
    %vm725 = vmor %vm723, %vm724
    %v726 = vsel %vm725, %v718, %v722
    %v727 = vand.u32 2147483647, %v717
    %vm728 = vcmp.eq.f32.partialorder %v727, 8.507059e+37
    %v729 = vand.u32 %v717, 2147483648
    %v730 = vor.u32 1.1754944e-38, %v729
    %v731 = vsel %vm728, %v730, %v726
    %v732 = vmul.f32 1.0, %v731
    %v733 = vtanh.pop %v710
    %735 = vrot.lane.b32.xlu0 %v733, 96
    %v736 = vpop.permute.xlu0 %735
    %v738 = vmul.f32 %v732, %v736
    %v739 = vtanh.pop %v738
    %741 = vrot.lane.b32.xlu0 %v739, 48
    %v742 = vpop.permute.xlu0 %741
    %v744 = vmul.f32 %v732, %v742
    %746 = vrot.lane.b32.xlu0 %v744, 80
    %v747 = vpop.permute.xlu0 %746
    %v748 = vsel %vm593, %v747, 0
    %750 = vmatpush.msra.mxu0 0.0
    %751 = vmatpush.msra.mxu0 0.0
    %752 = vmatpush.msra.mxu0 0.0
    %753 = vmatpush.msra.mxu0 0.0
    %754 = vmatpush.msra.mxu0 0.0
    %755 = vmatpush.msra.mxu0 0.0
    %756 = vmatpush.msra.mxu0 0.0
    %757 = vmatpush.msra.mxu0 0.0
    %758 = vmatpush.msra.mxu0 0.0
    %759 = vmatpush.msra.mxu0 0.0
    %760 = vmatpush.msra.mxu0 0.0
    %761 = vmatpush.msra.mxu0 0.0
    %762 = vmatpush.msra.mxu0 0.0
    %763 = vmatpush.msra.mxu0 0.0
    %764 = vmatpush.msra.mxu0 %v678
    %765 = vmatpush.msra.mxu0 %v677
    %766 = vmatmul.f32.gmra.mxu0 %v748
    %v767 = vpop.f32.mrf.mxu0
    %v768 = vadd.f32 0.0, %v767
    %769 = vdwg.mxu0
    %v771 = vrot.slane %v768, 7
    %v773 = vadd.f32 %v713, %v771
    %v774 = vxor.u32 %v773, 2147483648
    %v775 = vmul.f32 %v774, 1.442695
    %v776 = vpow.pop %v775
    %v777 = vadd.f32 %v776, 1.0
    %v778 = vrcp.pop %v777
    %v779 = vmul.f32 %v777, %v778
    %v780 = vsub.f32 1.0, %v779
    %v781 = vmul.f32 %v778, %v780
    %v782 = vadd.f32 %v778, %v781
    %vm783 = vweird.f32 %v777
    %vm784 = vweird.f32 %v778
    %vm785 = vmor %vm783, %vm784
    %v786 = vsel %vm785, %v778, %v782
    %v787 = vand.u32 2147483647, %v777
    %vm788 = vcmp.eq.f32.partialorder %v787, 8.507059e+37
    %v789 = vand.u32 %v777, 2147483648
    %v790 = vor.u32 1.1754944e-38, %v789
    %v791 = vsel %vm788, %v790, %v786
    %v792 = vmul.f32 1.0, %v791
    %v793 = vtanh.pop %v773
    %v795 = vrot.slane %v738, 7
    %796 = vrot.lane.b32.xlu0 %v795, 16
    %v797 = vpop.permute.xlu0 %796
    %v799 = vmul.f32 %v792, %v797
    %801 = vrot.lane.b32.xlu0 %v793, 96
    %v802 = vpop.permute.xlu0 %801
    %v804 = vmul.f32 %v792, %v802
    %806 = vrot.lane.b32.xlu0 %v804, 16
    %v807 = vpop.permute.xlu0 %806
    %v809 = vadd.f32 %v799, %v807
    %v810 = vtanh.pop %v809
    %812 = vrot.lane.b32.xlu0 %v810, 32
    %v813 = vpop.permute.xlu0 %812
    %v815 = vmul.f32 %v792, %v813
    %v818 = vrot.slane %v815, 1
    %819 = vrot.lane.b32.xlu0 %v818, 80
    %v820 = vpop.permute.xlu0 %819
    %v822 = vsel %vm66, %v747, %v820
    %v823 = vsel %vm66, %v820, %v747
    %v824 = vperm.slane %v822, 0
    %v825 = vperm.slane %v823, 0
    %v826 = vsel %vm671, %v825, %v824
    %s827 = scalar_lea.vmem %s3, 16
    %v828 = vld [vmem:[%s827] sm:$0xff]
    %v829 = vld [vmem:[%s827 + $0x8] sm:$0xff]
    %s830 = scalar_lea.vmem %s4, 32
    %v831 = vld [vmem:[%s830] sm:$0xff]
    %v832 = vld [vmem:[%s830 + $0x8] sm:$0xff]
    %s833 = scalar_lea.vmem %s5, 2
    %v834 = vld [vmem:[%s833] sm:$0x1]
    %v836 = vperm.slane %v834, 0
    %v839 = vsel %vm593, %v826, 0
    %841 = vmatpush.msra.mxu0 0.0
    %842 = vmatpush.msra.mxu0 0.0
    %843 = vmatpush.msra.mxu0 0.0
    %844 = vmatpush.msra.mxu0 0.0
    %845 = vmatpush.msra.mxu0 0.0
    %846 = vmatpush.msra.mxu0 0.0
    %847 = vmatpush.msra.mxu0 0.0
    %848 = vmatpush.msra.mxu0 0.0
    %849 = vmatpush.msra.mxu0 0.0
    %850 = vmatpush.msra.mxu0 0.0
    %851 = vmatpush.msra.mxu0 0.0
    %852 = vmatpush.msra.mxu0 0.0
    %853 = vmatpush.msra.mxu0 0.0
    %854 = vmatpush.msra.mxu0 0.0
    %855 = vmatpush.msra.mxu0 %v829
    %856 = vmatpush.msra.mxu0 %v828
    %857 = vmatmul.f32.gmra.mxu0 %v839
    %v858 = vpop.f32.mrf.mxu0
    %v859 = vadd.f32 %v836, %v858
    %860 = vdwg.mxu0
    %v862 = vrot.slane %v859, 1
    %v864 = vsel %vm65, %v859, %v862
    %v865 = vrot.slane %v859, 7
    %v867 = vsel %vm65, %v859, %v865
    %v868 = vxor.u32 %v864, 2147483648
    %v869 = vmul.f32 %v868, 1.442695
    %v870 = vpow.pop %v869
    %v871 = vadd.f32 %v870, 1.0
    %v872 = vrcp.pop %v871
    %v873 = vmul.f32 %v871, %v872
    %v874 = vsub.f32 1.0, %v873
    %v875 = vmul.f32 %v872, %v874
    %v876 = vadd.f32 %v872, %v875
    %vm877 = vweird.f32 %v871
    %vm878 = vweird.f32 %v872
    %vm879 = vmor %vm877, %vm878
    %v880 = vsel %vm879, %v872, %v876
    %v881 = vand.u32 2147483647, %v871
    %vm882 = vcmp.eq.f32.partialorder %v881, 8.507059e+37
    %v883 = vand.u32 %v871, 2147483648
    %v884 = vor.u32 1.1754944e-38, %v883
    %v885 = vsel %vm882, %v884, %v880
    %v886 = vmul.f32 1.0, %v885
    %v887 = vtanh.pop %v864
    %889 = vrot.lane.b32.xlu0 %v887, 96
    %v890 = vpop.permute.xlu0 %889
    %v892 = vmul.f32 %v886, %v890
    %v893 = vtanh.pop %v892
    %895 = vrot.lane.b32.xlu0 %v893, 48
    %v896 = vpop.permute.xlu0 %895
    %v898 = vmul.f32 %v886, %v896
    %900 = vrot.lane.b32.xlu0 %v898, 80
    %v901 = vpop.permute.xlu0 %900
    %v902 = vsel %vm593, %v901, 0
    %904 = vmatpush.msra.mxu0 0.0
    %905 = vmatpush.msra.mxu0 0.0
    %906 = vmatpush.msra.mxu0 0.0
    %907 = vmatpush.msra.mxu0 0.0
    %908 = vmatpush.msra.mxu0 0.0
    %909 = vmatpush.msra.mxu0 0.0
    %910 = vmatpush.msra.mxu0 0.0
    %911 = vmatpush.msra.mxu0 0.0
    %912 = vmatpush.msra.mxu0 0.0
    %913 = vmatpush.msra.mxu0 0.0
    %914 = vmatpush.msra.mxu0 0.0
    %915 = vmatpush.msra.mxu0 0.0
    %916 = vmatpush.msra.mxu0 0.0
    %917 = vmatpush.msra.mxu0 0.0
    %918 = vmatpush.msra.mxu0 %v832
    %919 = vmatpush.msra.mxu0 %v831
    %920 = vmatmul.f32.gmra.mxu0 %v902
    %v921 = vpop.f32.mrf.mxu0
    %v922 = vadd.f32 0.0, %v921
    %923 = vdwg.mxu0
    %v925 = vrot.slane %v922, 7
    %v927 = vadd.f32 %v867, %v925
    %v928 = vxor.u32 %v927, 2147483648
    %v929 = vmul.f32 %v928, 1.442695
    %v930 = vpow.pop %v929
    %v931 = vadd.f32 %v930, 1.0
    %v932 = vrcp.pop %v931
    %v933 = vmul.f32 %v931, %v932
    %v934 = vsub.f32 1.0, %v933
    %v935 = vmul.f32 %v932, %v934
    %v936 = vadd.f32 %v932, %v935
    %vm937 = vweird.f32 %v931
    %vm938 = vweird.f32 %v932
    %vm939 = vmor %vm937, %vm938
    %v940 = vsel %vm939, %v932, %v936
    %v941 = vand.u32 2147483647, %v931
    %vm942 = vcmp.eq.f32.partialorder %v941, 8.507059e+37
    %v943 = vand.u32 %v931, 2147483648
    %v944 = vor.u32 1.1754944e-38, %v943
    %v945 = vsel %vm942, %v944, %v940
    %v946 = vmul.f32 1.0, %v945
    %v947 = vtanh.pop %v927
    %v949 = vrot.slane %v892, 7
    %950 = vrot.lane.b32.xlu0 %v949, 16
    %v951 = vpop.permute.xlu0 %950
    %v953 = vmul.f32 %v946, %v951
    %955 = vrot.lane.b32.xlu0 %v947, 96
    %v956 = vpop.permute.xlu0 %955
    %v958 = vmul.f32 %v946, %v956
    %960 = vrot.lane.b32.xlu0 %v958, 16
    %v961 = vpop.permute.xlu0 %960
    %v963 = vadd.f32 %v953, %v961
    %v964 = vtanh.pop %v963
    %966 = vrot.lane.b32.xlu0 %v964, 32
    %v967 = vpop.permute.xlu0 %966
    %v969 = vmul.f32 %v946, %v967
    %v972 = vrot.slane %v969, 1
    %973 = vrot.lane.b32.xlu0 %v972, 80
    %v974 = vpop.permute.xlu0 %973
    %v976 = vsel %vm66, %v901, %v974
    %v977 = vsel %vm66, %v974, %v901
    %v978 = vperm.slane %v976, 0
    %v979 = vperm.slane %v977, 0
    %v980 = vsel %vm671, %v979, %v978
    %s981 = scalar_lea.vmem %s3, 32
    %v982 = vld [vmem:[%s981] sm:$0xff]
    %v983 = vld [vmem:[%s981 + $0x8] sm:$0xff]
    %s984 = scalar_lea.vmem %s4, 48
    %v985 = vld [vmem:[%s984] sm:$0xff]
    %v986 = vld [vmem:[%s984 + $0x8] sm:$0xff]
    %s987 = scalar_lea.vmem %s5, 3
    %v988 = vld [vmem:[%s987] sm:$0x1]
    %v990 = vperm.slane %v988, 0
    %v993 = vsel %vm593, %v980, 0
    %995 = vmatpush.msra.mxu0 0.0
    %996 = vmatpush.msra.mxu0 0.0
    %997 = vmatpush.msra.mxu0 0.0
    %998 = vmatpush.msra.mxu0 0.0
    %999 = vmatpush.msra.mxu0 0.0
    %1000 = vmatpush.msra.mxu0 0.0
    %1001 = vmatpush.msra.mxu0 0.0
    %1002 = vmatpush.msra.mxu0 0.0
    %1003 = vmatpush.msra.mxu0 0.0
    %1004 = vmatpush.msra.mxu0 0.0
    %1005 = vmatpush.msra.mxu0 0.0
    %1006 = vmatpush.msra.mxu0 0.0
    %1007 = vmatpush.msra.mxu0 0.0
    %1008 = vmatpush.msra.mxu0 0.0
    %1009 = vmatpush.msra.mxu0 %v983
    %1010 = vmatpush.msra.mxu0 %v982
    %1011 = vmatmul.f32.gmra.mxu0 %v993
    %v1012 = vpop.f32.mrf.mxu0
    %v1013 = vadd.f32 %v990, %v1012
    %1014 = vdwg.mxu0
    %v1016 = vrot.slane %v1013, 1
    %v1018 = vsel %vm65, %v1013, %v1016
    %v1019 = vrot.slane %v1013, 7
    %v1021 = vsel %vm65, %v1013, %v1019
    %v1022 = vxor.u32 %v1018, 2147483648
    %v1023 = vmul.f32 %v1022, 1.442695
    %v1024 = vpow.pop %v1023
    %v1025 = vadd.f32 %v1024, 1.0
    %v1026 = vrcp.pop %v1025
    %v1027 = vmul.f32 %v1025, %v1026
    %v1028 = vsub.f32 1.0, %v1027
    %v1029 = vmul.f32 %v1026, %v1028
    %v1030 = vadd.f32 %v1026, %v1029
    %vm1031 = vweird.f32 %v1025
    %vm1032 = vweird.f32 %v1026
    %vm1033 = vmor %vm1031, %vm1032
    %v1034 = vsel %vm1033, %v1026, %v1030
    %v1035 = vand.u32 2147483647, %v1025
    %vm1036 = vcmp.eq.f32.partialorder %v1035, 8.507059e+37
    %v1037 = vand.u32 %v1025, 2147483648
    %v1038 = vor.u32 1.1754944e-38, %v1037
    %v1039 = vsel %vm1036, %v1038, %v1034
    %v1040 = vmul.f32 1.0, %v1039
    %v1041 = vtanh.pop %v1018
    %1043 = vrot.lane.b32.xlu0 %v1041, 96
    %v1044 = vpop.permute.xlu0 %1043
    %v1046 = vmul.f32 %v1040, %v1044
    %v1047 = vtanh.pop %v1046
    %1049 = vrot.lane.b32.xlu0 %v1047, 48
    %v1050 = vpop.permute.xlu0 %1049
    %v1052 = vmul.f32 %v1040, %v1050
    %1054 = vrot.lane.b32.xlu0 %v1052, 80
    %v1055 = vpop.permute.xlu0 %1054
    %v1056 = vsel %vm593, %v1055, 0
    %1058 = vmatpush.msra.mxu0 0.0
    %1059 = vmatpush.msra.mxu0 0.0
    %1060 = vmatpush.msra.mxu0 0.0
    %1061 = vmatpush.msra.mxu0 0.0
    %1062 = vmatpush.msra.mxu0 0.0
    %1063 = vmatpush.msra.mxu0 0.0
    %1064 = vmatpush.msra.mxu0 0.0
    %1065 = vmatpush.msra.mxu0 0.0
    %1066 = vmatpush.msra.mxu0 0.0
    %1067 = vmatpush.msra.mxu0 0.0
    %1068 = vmatpush.msra.mxu0 0.0
    %1069 = vmatpush.msra.mxu0 0.0
    %1070 = vmatpush.msra.mxu0 0.0
    %1071 = vmatpush.msra.mxu0 0.0
    %1072 = vmatpush.msra.mxu0 %v986
    %1073 = vmatpush.msra.mxu0 %v985
    %1074 = vmatmul.f32.gmra.mxu0 %v1056
    %v1075 = vpop.f32.mrf.mxu0
    %v1076 = vadd.f32 0.0, %v1075
    %1077 = vdwg.mxu0
    %v1079 = vrot.slane %v1076, 7
    %v1081 = vadd.f32 %v1021, %v1079
    %v1082 = vxor.u32 %v1081, 2147483648
    %v1083 = vmul.f32 %v1082, 1.442695
    %v1084 = vpow.pop %v1083
    %v1085 = vadd.f32 %v1084, 1.0
    %v1086 = vrcp.pop %v1085
    %v1087 = vmul.f32 %v1085, %v1086
    %v1088 = vsub.f32 1.0, %v1087
    %v1089 = vmul.f32 %v1086, %v1088
    %v1090 = vadd.f32 %v1086, %v1089
    %vm1091 = vweird.f32 %v1085
    %vm1092 = vweird.f32 %v1086
    %vm1093 = vmor %vm1091, %vm1092
    %v1094 = vsel %vm1093, %v1086, %v1090
    %v1095 = vand.u32 2147483647, %v1085
    %vm1096 = vcmp.eq.f32.partialorder %v1095, 8.507059e+37
    %v1097 = vand.u32 %v1085, 2147483648
    %v1098 = vor.u32 1.1754944e-38, %v1097
    %v1099 = vsel %vm1096, %v1098, %v1094
    %v1100 = vmul.f32 1.0, %v1099
    %v1101 = vtanh.pop %v1081
    %v1103 = vrot.slane %v1046, 7
    %1104 = vrot.lane.b32.xlu0 %v1103, 16
    %v1105 = vpop.permute.xlu0 %1104
    %v1107 = vmul.f32 %v1100, %v1105
    %1109 = vrot.lane.b32.xlu0 %v1101, 96
    %v1110 = vpop.permute.xlu0 %1109
    %v1112 = vmul.f32 %v1100, %v1110
    %1114 = vrot.lane.b32.xlu0 %v1112, 16
    %v1115 = vpop.permute.xlu0 %1114
    %v1117 = vadd.f32 %v1107, %v1115
    %v1118 = vtanh.pop %v1117
    %1120 = vrot.lane.b32.xlu0 %v1118, 32
    %v1121 = vpop.permute.xlu0 %1120
    %v1123 = vmul.f32 %v1100, %v1121
    %v1126 = vrot.slane %v1123, 1
    %1127 = vrot.lane.b32.xlu0 %v1126, 80
    %v1128 = vpop.permute.xlu0 %1127
    %v1130 = vsel %vm66, %v1055, %v1128
    %v1131 = vsel %vm66, %v1128, %v1055
    %v1132 = vperm.slane %v1130, 0
    %v1133 = vperm.slane %v1131, 0
    %v1134 = vsel %vm671, %v1133, %v1132
    %v1135 = vld [vmem:[%s7] sm:$0xff]
    %v1136 = vld [vmem:[%s7 + $0x8] sm:$0xff]
    %v1138 = vsel %vm593, %v1134, 0
    %1140 = vmatpush.msra.mxu0 0.0
    %1141 = vmatpush.msra.mxu0 0.0
    %1142 = vmatpush.msra.mxu0 0.0
    %1143 = vmatpush.msra.mxu0 0.0
    %1144 = vmatpush.msra.mxu0 0.0
    %1145 = vmatpush.msra.mxu0 0.0
    %1146 = vmatpush.msra.mxu0 0.0
    %1147 = vmatpush.msra.mxu0 0.0
    %1148 = vmatpush.msra.mxu0 0.0
    %1149 = vmatpush.msra.mxu0 0.0
    %1150 = vmatpush.msra.mxu0 0.0
    %1151 = vmatpush.msra.mxu0 0.0
    %1152 = vmatpush.msra.mxu0 0.0
    %1153 = vmatpush.msra.mxu0 0.0
    %1154 = vmatpush.msra.mxu0 %v1136
    %1155 = vmatpush.msra.mxu0 %v1135
    %1156 = vmatmul.f32.gmra.mxu0 %v1138
    %v1157 = vpop.f32.mrf.mxu0
    %v1158 = vadd.f32 %v398, %v1157
    %1159 = vdwg.mxu0
    %v1160 = vld [vmem:[%s8] sm:$0x1]
    %v1162 = vperm.slane %v1160, 0
    %v1164 = vadd.f32 %v1158, %v1162
    %v1165 = vld [vmem:[%s9] sm:$0xff]
    %v1166 = vld [vmem:[%s9 + $0x8] sm:$0xff]
    %v1167 = vld [vmem:[%s9 + $0x10] sm:$0xff]
    %v1168 = vld [vmem:[%s9 + $0x18] sm:$0xff]
    %v1169 = vld [vmem:[%s9 + $0x20] sm:$0xff]
    %v1170 = vld [vmem:[%s9 + $0x28] sm:$0xff]
    %v1171 = vld [vmem:[%s9 + $0x30] sm:$0xff]
    %v1172 = vld [vmem:[%s9 + $0x38] sm:$0xff]
    %v1173 = vld [vmem:[%s9 + $0x40] sm:$0xff]
    %v1174 = vld [vmem:[%s9 + $0x48] sm:$0xff]
    %v1175 = vld [vmem:[%s9 + $0x50] sm:$0xff]
    %v1176 = vld [vmem:[%s9 + $0x58] sm:$0xff]
    %v1177 = vld [vmem:[%s9 + $0x60] sm:$0xff]
    %v1178 = vld [vmem:[%s9 + $0x68] sm:$0xff]
    %v1179 = vld [vmem:[%s9 + $0x70] sm:$0xff]
    %v1180 = vld [vmem:[%s9 + $0x78] sm:$0xff]
    %v1181 = vld [vmem:[%s10] sm:$0x1]
    %v1183 = vperm.slane %v1181, 0
    %1185 = vmatpush.msra.mxu0 %v1180
    %1186 = vmatpush.msra.mxu0 %v1179
    %1187 = vmatpush.msra.mxu0 %v1178
    %1188 = vmatpush.msra.mxu0 %v1177
    %1189 = vmatpush.msra.mxu0 %v1176
    %1190 = vmatpush.msra.mxu0 %v1175
    %1191 = vmatpush.msra.mxu0 %v1174
    %1192 = vmatpush.msra.mxu0 %v1173
    %1193 = vmatpush.msra.mxu0 %v1172
    %1194 = vmatpush.msra.mxu0 %v1171
    %1195 = vmatpush.msra.mxu0 %v1170
    %1196 = vmatpush.msra.mxu0 %v1169
    %1197 = vmatpush.msra.mxu0 %v1168
    %1198 = vmatpush.msra.mxu0 %v1167
    %1199 = vmatpush.msra.mxu0 %v1166
    %1200 = vmatpush.msra.mxu0 %v1165
    %1201 = vmatmul.f32.gmra.mxu0 %v1164
    %v1202 = vpop.f32.mrf.mxu0
    %v1203 = vadd.f32 %v1183, %v1202
    %1204 = vdwg.mxu0
    %vm1205 = vcmask 25600
    %1206 = vst.msk [vmem:[#allocation2] sm:$0x3] %vm1205, %v1203
    %v1207 = vld [vmem:[%s11] sm:$0x1]
    %v1209 = vperm.slane %v1207, 0
    %v1211 = vadd.f32 %v518, %v1209
    %v1212 = vld [vmem:[%s12] sm:$0xff]
    %v1213 = vld [vmem:[%s12 + $0x8] sm:$0xff]
    %v1214 = vld [vmem:[%s12 + $0x10] sm:$0xff]
    %v1215 = vld [vmem:[%s12 + $0x18] sm:$0xff]
    %v1216 = vld [vmem:[%s12 + $0x20] sm:$0xff]
    %v1217 = vld [vmem:[%s12 + $0x28] sm:$0xff]
    %v1218 = vld [vmem:[%s12 + $0x30] sm:$0xff]
    %v1219 = vld [vmem:[%s12 + $0x38] sm:$0xff]
    %v1220 = vld [vmem:[%s13] sm:$0x1]
    %v1222 = vperm.slane %v1220, 0
    %vm1224 = vcmask 523264
    %v1226 = vsel %vm1224, %v1211, 0
    %1228 = vmatpush.msra.mxu0 0.0
    %1229 = vmatpush.msra.mxu0 0.0
    %1230 = vmatpush.msra.mxu0 0.0
    %1231 = vmatpush.msra.mxu0 0.0
    %1232 = vmatpush.msra.mxu0 0.0
    %1233 = vmatpush.msra.mxu0 0.0
    %1234 = vmatpush.msra.mxu0 0.0
    %1235 = vmatpush.msra.mxu0 0.0
    %1236 = vmatpush.msra.mxu0 %v1219
    %1237 = vmatpush.msra.mxu0 %v1218
    %1238 = vmatpush.msra.mxu0 %v1217
    %1239 = vmatpush.msra.mxu0 %v1216
    %1240 = vmatpush.msra.mxu0 %v1215
    %1241 = vmatpush.msra.mxu0 %v1214
    %1242 = vmatpush.msra.mxu0 %v1213
    %1243 = vmatpush.msra.mxu0 %v1212
    %1244 = vmatmul.f32.gmra.mxu0 %v1226
    %v1245 = vpop.f32.mrf.mxu0
    %v1246 = vadd.f32 %v1222, %v1245
    %1247 = vdwg.mxu0
    %vm1248 = vcmask 33792
    %1249 = vst.msk [vmem:[#allocation4] sm:$0x3] %vm1248, %v1246
    // Predicated region
    $region58: #{bpm_mt_forward.1} parent=1 // pred_check
      _
    $region59: #{bpm_mt_forward.1} parent=1 // pred_check_branch
      %1251 = sbr.rel (0) target = $region61
    $region60: #{bpm_mt_forward.1} parent=1 // pred_region
      %1253 = vsyncadd [#allocation3], 0
      %s1255 = sshll.u32 [#allocation2], 4
      %s1256 = int_to_ptr.vmem [resolvable:$true] %s1255
      %s1257 = sshll.u32 %s14, 4
      %s1258 = int_to_ptr.hbm [resolvable:$true] %s1257
      %1260 = dma.vmem_to_hbm [thread:$0]  %s1256, 32, %s1258, [#allocation3]
    $region61: #{bpm_mt_forward.1} parent=1 // pred_fallthru
      _
    // Predicated region
    $region62: #{bpm_mt_forward.1} parent=1 // pred_check
      _
    $region63: #{bpm_mt_forward.1} parent=1 // pred_check_branch
      %1262 = sbr.rel (0) target = $region65
    $region64: #{bpm_mt_forward.1} parent=1 // pred_region
      %1264 = vsyncadd [#allocation5], 0
      %s1266 = sshll.u32 [#allocation4], 4
      %s1267 = int_to_ptr.vmem [resolvable:$true] %s1266
      %s1268 = sshll.u32 %s15, 4
      %s1269 = int_to_ptr.hbm [resolvable:$true] %s1268
      %1271 = dma.vmem_to_hbm [thread:$0]  %s1267, 32, %s1269, [#allocation5]
    $region65: #{bpm_mt_forward.1} parent=1 // pred_fallthru
      _
    // Predicated region
    $region66: #{bpm_mt_forward.1} parent=1 // pred_check
      _
    $region67: #{bpm_mt_forward.1} parent=1 // pred_check_branch
      %1273 = sbr.rel (0) target = $region69
    $region68: #{bpm_mt_forward.1} parent=1 // pred_region
      %1275 = dma.done [#allocation3], 32
    $region69: #{bpm_mt_forward.1} parent=1 // pred_fallthru
      _
    // Predicated region
    $region70: #{bpm_mt_forward.1} parent=1 // pred_check
      _
    $region71: #{bpm_mt_forward.1} parent=1 // pred_check_branch
      %1277 = sbr.rel (0) target = $region73
    $region72: #{bpm_mt_forward.1} parent=1 // pred_region
      %1279 = dma.done [#allocation5], 32
    $region73: #{bpm_mt_forward.1} parent=1 // pred_fallthru
      _
    %1280 = vsyncpa [#allocation3], 1
    %1281 = vsyncpa [#allocation5], 1

</llo_original>
